<compile_context>
chip_gen: v7x
topology: tpu7x:2x2x1
jax: 0.10.0
libtpu: 0.0.40
codegen_flags: <defaults>
</compile_context>

<pallas_src>
import functools

import jax
import jax.numpy as jnp
from jax.experimental import pallas as pl
from jax.experimental.pallas import tpu as pltpu

TAU = 2.0      # LIFNode default
V_TH = 1.0     # LIFNode default
BN_EPS = 1e-5  # BatchNorm2d default


# ------------------------------- fused kernel ------------------------------- #

def _bottleneck_kernel(x_ref, w1_ref, w2_ref, w3_ref, thr_ref,
                       o_ref, s_ref, *, H, W, dil, connect):
    """One batch element: conv1x1+LIF -> conv3x3+LIF -> conv1x1+LIF -> connect.

    BN scales are pre-folded into the weights; BN bias / tau / v_th are folded
    into per-channel thresholds (rows 0..2 of thr_ref), so every LIF stage is a
    single f32 compare against a threshold row.
    """
    HW = H * W
    wp = w1_ref.shape[1]       # bottleneck width
    cout = w3_ref.shape[1]     # output channels (== input channels)
    mmdt = w2_ref.dtype        # matmul dtype for stages 2/3 (bf16 by default)

    # ---- stage 1: 1x1 conv (BN scale folded into w1) + LIF ------------------
    y1 = jnp.dot(x_ref[0], w1_ref[...], preferred_element_type=jnp.float32)
    spk1 = (y1 >= thr_ref[0:1, :wp]).astype(jnp.float32).reshape(H, W, wp)

    # ---- stage 2: 3x3 conv (padding=dil, dilation=dil) ----------------------
    # Three kw-shifted copies of the spike map live side by side along lanes in
    # a row-padded scratch.  Each kh tap is then a slice along the major row
    # axis (always aligned) and the 3 kw taps form one K = 3*wp contraction.
    zrow = jnp.zeros((dil, W, 3 * wp), s_ref.dtype)
    s_ref[0:dil] = zrow                               # top halo rows
    s_ref[dil + H:dil + H + dil] = zrow               # bottom halo rows
    zcol = jnp.zeros((H, dil, wp), s_ref.dtype)
    s_ref[dil:dil + H, 0:dil, 0:wp] = zcol            # kw=0 left border
    s_ref[dil:dil + H, W - dil:W, 2 * wp:3 * wp] = zcol   # kw=2 right border

    s_ref[dil:dil + H, dil:W, 0:wp] = spk1[:, 0:W - dil, :]          # kw=0 (w-dil)
    s_ref[dil:dil + H, :, wp:2 * wp] = spk1                          # kw=1 (center)
    s_ref[dil:dil + H, 0:W - dil, 2 * wp:3 * wp] = spk1[:, dil:W, :]  # kw=2 (w+dil)

    y2 = None
    for kh in range(3):
        a = s_ref[kh * dil:kh * dil + H, :, :].reshape(HW, 3 * wp).astype(mmdt)
        d = jnp.dot(a, w2_ref[kh], preferred_element_type=jnp.float32)
        y2 = d if y2 is None else y2 + d
    spk2 = (y2 >= thr_ref[1:2, :wp]).astype(mmdt)

    # ---- stage 3: 1x1 conv + LIF + residual connect --------------------------
    y3 = jnp.dot(spk2, w3_ref[...], preferred_element_type=jnp.float32)
    spk3 = (y3 >= thr_ref[2:3, :cout]).astype(jnp.float32)
    ident = x_ref[0]   # re-read the resident input block (keeps it dead across
                       # stages 1-3 -> lower vreg / compiler-VMEM pressure)
    if connect == "ADD":
        out = spk3 + ident
    elif connect == "AND":
        out = spk3 * ident
    elif connect == "IAND":
        out = ident * (1.0 - spk3)
    else:
        raise NotImplementedError(connect)
    o_ref[0] = out.astype(o_ref.dtype)


# ------------------------------ host-side glue ------------------------------ #

def _fold_bn(w_oihw, bn):
    """Fold eval-mode BN: scale into the conv weight, bias/tau/v_th into a threshold.

    Returns w: (kh, kw, Cin, Cout) f32 and thr: (Cout,) with
      spike  <=>  (conv(x)*scale + bias)/tau >= v_th  <=>  conv_scaled(x) >= thr.
    """
    gamma, beta, mean, var = bn
    scale = gamma / jnp.sqrt(var + BN_EPS)            # (Cout,)
    bias = beta - mean * scale                        # (Cout,)
    thr = V_TH * TAU - bias                           # (Cout,)
    w = w_oihw * scale[:, None, None, None]
    w = jnp.transpose(w, (2, 3, 1, 0))                # (kh, kw, Cin, Cout)
    return w.astype(jnp.float32), thr.astype(jnp.float32)


def bottleneck_forward(x_nchw, params, connect_f="ADD", stride=1, dilation=1,
                       groups=1, matmul_dtype=jnp.bfloat16):
    """Fused Bottleneck forward. x_nchw: (N, Cin, H, W) f32 -> (N, planes*4, H, W)."""
    N, Cin, H, W = x_nchw.shape
    # TODO(synk): stride > 1 (needs the downsample branch) and groups > 1 are not
    # implemented; the module defaults (stride=1, groups=1, downsample=None) are.
    assert stride == 1 and groups == 1

    w1, thr1 = _fold_bn(params["w1"], params["bn1"])     # (1,1,Cin,width)
    w2, thr2 = _fold_bn(params["w2"], params["bn2"])     # (3,3,width,width)
    w3, thr3 = _fold_bn(params["w3"], params["bn3"])     # (1,1,width,Cout)
    width = w1.shape[3]
    cout = w3.shape[3]
    assert Cin == cout, "identity path requires inplanes == planes*expansion"

    w1f = w1[0, 0]                                            # (Cin, width) f32
    # conv2 weights stacked per kh with the 3 kw taps along K: (3, 3*width, width).
    w2f = w2.reshape(3, 3 * width, width).astype(matmul_dtype)
    w3f = w3[0, 0].astype(matmul_dtype)                       # (width, Cout)

    tc = max(width, cout)
    thr = jnp.full((8, tc), 1e30, jnp.float32)                # padded cols never spike
    thr = thr.at[0, :width].set(thr1)
    thr = thr.at[1, :width].set(thr2)
    thr = thr.at[2, :cout].set(thr3)

    # NCHW -> (N, H*W, Cin).  Channels are deliberately NOT padded to 128 lanes
    # in HBM: at small channel counts the kernel is HBM-bound and padding would
    # multiply I/O DMA (real ResNet channel counts are already lane-friendly).
    HW = H * W
    x = jnp.transpose(x_nchw, (0, 2, 3, 1)).reshape(N, HW, Cin).astype(jnp.float32)

    Hp = H + 2 * dilation
    mm_bytes = jnp.dtype(matmul_dtype).itemsize
    # Explicit scoped-VMEM budget: double-buffered I/O blocks + weights + scratch
    # + a margin for compiler temporaries.
    est = 2 * HW * (Cin + cout) * 4
    est += 2 * (Cin * width * 4 + 3 * 3 * width * width * mm_bytes
                + width * cout * mm_bytes + 8 * tc * 4)
    est += Hp * W * 3 * width * 4
    est += 8 * HW * max(3 * width, cout, Cin) * 4
    vmem_limit = int(min(max(2 * est, 16 * 2 ** 20), 64 * 2 ** 20))

    # TODO(synk): for large H*W (and on v7x's 64 MiB VMEM) add a spatial row-tile
    # grid axis with a +/-dilation row halo instead of one full image per step,
    # and mark the constant-index weight specs with pipeline_mode=pl.Buffered(1).
    out = pl.pallas_call(
        functools.partial(_bottleneck_kernel, H=H, W=W, dil=dilation,
                          connect=connect_f),
        out_shape=jax.ShapeDtypeStruct((N, HW, cout), jnp.float32),
        grid_spec=pltpu.PrefetchScalarGridSpec(
            num_scalar_prefetch=0,
            grid=(N,),
            in_specs=[
                pl.BlockSpec((1, HW, Cin), lambda b: (b, 0, 0)),           # x / identity
                pl.BlockSpec((Cin, width), lambda b: (0, 0)),              # conv1 (f32)
                pl.BlockSpec((3, 3 * width, width), lambda b: (0, 0, 0)),  # conv2
                pl.BlockSpec((width, cout), lambda b: (0, 0)),             # conv3
                pl.BlockSpec((8, tc), lambda b: (0, 0)),                   # thresholds
            ],
            out_specs=pl.BlockSpec((1, HW, cout), lambda b: (b, 0, 0)),
            scratch_shapes=[
                # TODO(synk): a bf16 scratch would halve stage-2 VMEM traffic; the
                # dil-offset sublane stores are kept f32 here for robust lowering.
                pltpu.VMEM((Hp, W, 3 * width), jnp.float32),
            ],
        ),
        compiler_params=pltpu.CompilerParams(
            dimension_semantics=("parallel",),    # batch axis shards across TCs
            vmem_limit_bytes=vmem_limit,
        ),
    )(x, w1f, w2f, w3f, thr)

    out = out.reshape(N, H, W, cout)
    return jnp.transpose(out, (0, 3, 1, 2))       # back to NCHW


# ---------------------------- pure-JAX reference ---------------------------- #

def _ref_forward(x_nchw, params, connect_f="ADD", dilation=1):
    def lif(y):
        return (y / TAU >= V_TH).astype(jnp.float32)

    def bn(y, g, b, m, v):        # y: (..., C)
        return (y - m) / jnp.sqrt(v + BN_EPS) * g + b

    x = jnp.transpose(x_nchw, (0, 2, 3, 1))                    # NHWC
    w1 = params["w1"][:, :, 0, 0].T
    o = lif(bn(x @ w1, *params["bn1"]))                        # (N,H,W,width)
    w2 = jnp.transpose(params["w2"], (2, 3, 1, 0))             # HWIO
    o = jax.lax.conv_general_dilated(
        o, w2, window_strides=(1, 1),
        padding=[(dilation, dilation), (dilation, dilation)],
        rhs_dilation=(dilation, dilation),
        dimension_numbers=("NHWC", "HWIO", "NHWC"))
    o = lif(bn(o, *params["bn2"]))
    w3 = params["w3"][:, :, 0, 0].T
    o = lif(bn(o @ w3, *params["bn3"]))
    ident = x
    if connect_f == "ADD":
        o = o + ident
    elif connect_f == "AND":
        o = o * ident
    elif connect_f == "IAND":
        o = ident * (1.0 - o)
    return jnp.transpose(o, (0, 3, 1, 2))


# ----------------------------------- main ----------------------------------- #

if __name__ == "__main__":
    # Bottleneck(inplanes=16, planes=4): width = 4, output channels = 16 == inplanes.
    N, inplanes, H, W = 2, 16, 16, 16
    planes, groups, base_width, dilation, stride = 4, 1, 64, 1, 1
    width = int(planes * (base_width / 64.0)) * groups
    out_ch = planes * 4

    key = jax.random.PRNGKey(0)
    ks = jax.random.split(key, 8)

    x = jax.random.normal(ks[0], (N, inplanes, H, W), jnp.float32) * 3.0

    def bn_params(k, c):
        k1, k2, k3, k4 = jax.random.split(k, 4)
        gamma = 1.0 + 0.1 * jax.random.normal(k1, (c,), jnp.float32)
        beta = 0.1 * jax.random.normal(k2, (c,), jnp.float32)
        mean = 0.05 * jax.random.normal(k3, (c,), jnp.float32)
        var = 0.5 + 0.5 * jnp.abs(jax.random.normal(k4, (c,), jnp.float32))
        return gamma, beta, mean, var

    params = {
        # conv weights kept in PyTorch layout (Cout, Cin, kh, kw), bias=False
        "w1": 0.4 * jax.random.normal(ks[1], (width, inplanes, 1, 1), jnp.float32),
        "w2": 0.4 * jax.random.normal(ks[2], (width, width, 3, 3), jnp.float32),
        "w3": 0.4 * jax.random.normal(ks[3], (out_ch, width, 1, 1), jnp.float32),
        "bn1": bn_params(ks[4], width),
        "bn2": bn_params(ks[5], width),
        "bn3": bn_params(ks[6], out_ch),
    }

    ref = _ref_forward(x, params, connect_f="ADD", dilation=dilation)

    # f32-matmul variant: validates the kernel logic tightly (spike outputs
    # normally match the reference exactly; the tolerance only covers the rare
    # rounding-induced threshold flip from different accumulation orders).
    out32 = bottleneck_forward(x, params, connect_f="ADD", stride=stride,
                               dilation=dilation, groups=groups,
                               matmul_dtype=jnp.float32)
    out32 = jax.block_until_ready(out32)
    assert out32.shape == (N, out_ch, H, W), out32.shape
    bad32 = float(jnp.mean(jnp.abs(out32 - ref) > 1e-3))
    assert bad32 < 2e-3, f"f32 mismatch fraction {bad32}"

    # Default bf16-matmul variant (production path): spikes are exactly 0/1, so
    # only the bf16 rounding of the folded conv2/conv3 weights can flip a
    # borderline threshold compare; each flip cascades to at most a 3x3 x Cout
    # neighbourhood of the output, well under the bound below.
    outbf = bottleneck_forward(x, params, connect_f="ADD", stride=stride,
                               dilation=dilation, groups=groups,
                               matmul_dtype=jnp.bfloat16)
    outbf = jax.block_until_ready(outbf)
    assert outbf.shape == (N, out_ch, H, W), outbf.shape
    badbf = float(jnp.mean(jnp.abs(outbf - ref) > 1e-3))
    assert badbf < 5e-2, f"bf16 mismatch fraction {badbf}"

    print("KERNEL_OK")
</pallas_src>

<mosaic_0001>
module attributes {stable_mosaic.version = 11 : i64} {
  func.func @_bottleneck_kernel(%arg0: i32, %arg1: memref<1x256x16xf32, #tpu.memory_space<vmem>>, %arg2: memref<16x4xf32, #tpu.memory_space<vmem>>, %arg3: memref<3x12x4xf32, #tpu.memory_space<vmem>>, %arg4: memref<4x16xf32, #tpu.memory_space<vmem>>, %arg5: memref<8x16xf32, #tpu.memory_space<vmem>>, %arg6: memref<1x256x16xf32, #tpu.memory_space<vmem>>, %arg7: memref<18x16x12xf32, #tpu.memory_space<vmem>>) attributes {dimension_semantics = [#tpu.dimension_semantics<parallel>], iteration_bounds = array<i64: 2>, scalar_prefetch = 0 : i64, scratch_operands = 1 : i64, tpu.core_type = #tpu.core_type<tc>, window_params = [{transform_indices = @transform_0, window_bounds = array<i64: 1, 256, 16>}, {pipeline_mode = #tpu.pipeline_mode<synchronous>, transform_indices = @transform_1, window_bounds = array<i64: 16, 4>}, {pipeline_mode = #tpu.pipeline_mode<synchronous>, transform_indices = @transform_2, window_bounds = array<i64: 3, 12, 4>}, {pipeline_mode = #tpu.pipeline_mode<synchronous>, transform_indices = @transform_3, window_bounds = array<i64: 4, 16>}, {pipeline_mode = #tpu.pipeline_mode<synchronous>, transform_indices = @transform_4, window_bounds = array<i64: 8, 16>}, {transform_indices = @transform_5, window_bounds = array<i64: 1, 256, 16>}]} {
    %c0 = arith.constant 0 : index
    %c0_0 = arith.constant 0 : index
    %c0_1 = arith.constant 0 : index
    %0 = vector.load %arg1[%c0, %c0_0, %c0_1] : memref<1x256x16xf32, #tpu.memory_space<vmem>>, vector<1x256x16xf32>
    %1 = vector.shape_cast %0 : vector<1x256x16xf32> to vector<256x16xf32>
    %c0_2 = arith.constant 0 : index
    %c0_3 = arith.constant 0 : index
    %2 = vector.load %arg2[%c0_2, %c0_3] : memref<16x4xf32, #tpu.memory_space<vmem>>, vector<16x4xf32>
    %cst = arith.constant dense<0.000000e+00> : vector<256x4xf32>
    %3 = tpu.matmul %1, %2, %cst {dimension_numbers = #tpu.dot_dimension_numbers<[1], [0], [0], [1], [0, 0, 1, 1], [], []>} : vector<256x16xf32>, vector<16x4xf32>, vector<256x4xf32> -> vector<256x4xf32>
    %c0_4 = arith.constant 0 : index
    %c0_5 = arith.constant 0 : index
    %4 = vector.load %arg5[%c0_4, %c0_5] : memref<8x16xf32, #tpu.memory_space<vmem>>, vector<1x4xf32>
    %5 = vector.broadcast %4 : vector<1x4xf32> to vector<256x4xf32>
    %6 = arith.cmpf oge, %3, %5 : vector<256x4xf32>
    %7 = arith.extui %6 : vector<256x4xi1> to vector<256x4xi32>
    %8 = arith.sitofp %7 : vector<256x4xi32> to vector<256x4xf32>
    %9 = vector.shape_cast %8 : vector<256x4xf32> to vector<16x16x4xf32>
    %cst_6 = arith.constant 0.000000e+00 : f32
    %10 = vector.broadcast %cst_6 : f32 to vector<1x16x12xf32>
    %c0_7 = arith.constant 0 : index
    %c0_8 = arith.constant 0 : index
    %c0_9 = arith.constant 0 : index
    %11 = vector.load %arg7[%c0_7, %c0_8, %c0_9] : memref<18x16x12xf32, #tpu.memory_space<vmem>>, vector<1x16x12xf32>
    tpu.vector_store %arg7[%c0_7, %c0_8, %c0_9], %10 {strides = array<i32>} : memref<18x16x12xf32, #tpu.memory_space<vmem>>, vector<1x16x12xf32>,
    %c17 = arith.constant 17 : index
    %c0_10 = arith.constant 0 : index
    %c0_11 = arith.constant 0 : index
    %12 = vector.load %arg7[%c17, %c0_10, %c0_11] : memref<18x16x12xf32, #tpu.memory_space<vmem>>, vector<1x16x12xf32>
    tpu.vector_store %arg7[%c17, %c0_10, %c0_11], %10 {strides = array<i32>} : memref<18x16x12xf32, #tpu.memory_space<vmem>>, vector<1x16x12xf32>,
    %cst_12 = arith.constant 0.000000e+00 : f32
    %13 = vector.broadcast %cst_12 : f32 to vector<16x1x4xf32>
    %c1 = arith.constant 1 : index
    %c0_13 = arith.constant 0 : index
    %c0_14 = arith.constant 0 : index
    %14 = vector.load %arg7[%c1, %c0_13, %c0_14] : memref<18x16x12xf32, #tpu.memory_space<vmem>>, vector<16x1x4xf32>
    tpu.vector_store %arg7[%c1, %c0_13, %c0_14], %13 {strides = array<i32>} : memref<18x16x12xf32, #tpu.memory_space<vmem>>, vector<16x1x4xf32>,
    %c1_15 = arith.constant 1 : index
    %c15 = arith.constant 15 : index
    %c8 = arith.constant 8 : index
    %15 = vector.load %arg7[%c1_15, %c15, %c8] : memref<18x16x12xf32, #tpu.memory_space<vmem>>, vector<16x1x4xf32>
    tpu.vector_store %arg7[%c1_15, %c15, %c8], %13 {strides = array<i32>} : memref<18x16x12xf32, #tpu.memory_space<vmem>>, vector<16x1x4xf32>,
    %16 = vector.extract_strided_slice %9 {offsets = [0, 0, 0], sizes = [16, 15, 4], strides = [1, 1, 1]} : vector<16x16x4xf32> to vector<16x15x4xf32>
    %c1_16 = arith.constant 1 : index
    %c1_17 = arith.constant 1 : index
    %c0_18 = arith.constant 0 : index
    %17 = vector.load %arg7[%c1_16, %c1_17, %c0_18] : memref<18x16x12xf32, #tpu.memory_space<vmem>>, vector<16x15x4xf32>
    tpu.vector_store %arg7[%c1_16, %c1_17, %c0_18], %16 {strides = array<i32>} : memref<18x16x12xf32, #tpu.memory_space<vmem>>, vector<16x15x4xf32>,
    %c1_19 = arith.constant 1 : index
    %c0_20 = arith.constant 0 : index
    %c4 = arith.constant 4 : index
    %18 = vector.load %arg7[%c1_19, %c0_20, %c4] : memref<18x16x12xf32, #tpu.memory_space<vmem>>, vector<16x16x4xf32>
    tpu.vector_store %arg7[%c1_19, %c0_20, %c4], %9 {strides = array<i32>} : memref<18x16x12xf32, #tpu.memory_space<vmem>>, vector<16x16x4xf32>,
    %19 = vector.extract_strided_slice %9 {offsets = [0, 1, 0], sizes = [16, 15, 4], strides = [1, 1, 1]} : vector<16x16x4xf32> to vector<16x15x4xf32>
    %c1_21 = arith.constant 1 : index
    %c0_22 = arith.constant 0 : index
    %c8_23 = arith.constant 8 : index
    %20 = vector.load %arg7[%c1_21, %c0_22, %c8_23] : memref<18x16x12xf32, #tpu.memory_space<vmem>>, vector<16x15x4xf32>
    tpu.vector_store %arg7[%c1_21, %c0_22, %c8_23], %19 {strides = array<i32>} : memref<18x16x12xf32, #tpu.memory_space<vmem>>, vector<16x15x4xf32>,
    %c0_24 = arith.constant 0 : index
    %c0_25 = arith.constant 0 : index
    %c0_26 = arith.constant 0 : index
    %21 = vector.load %arg7[%c0_24, %c0_25, %c0_26] : memref<18x16x12xf32, #tpu.memory_space<vmem>>, vector<16x16x12xf32>
    %22 = vector.shape_cast %21 : vector<16x16x12xf32> to vector<256x12xf32>
    %c0_27 = arith.constant 0 : index
    %c0_28 = arith.constant 0 : index
    %c0_29 = arith.constant 0 : index
    %23 = vector.load %arg3[%c0_27, %c0_28, %c0_29] : memref<3x12x4xf32, #tpu.memory_space<vmem>>, vector<1x12x4xf32>
    %24 = vector.shape_cast %23 : vector<1x12x4xf32> to vector<12x4xf32>
    %cst_30 = arith.constant dense<0.000000e+00> : vector<256x4xf32>
    %25 = tpu.matmul %22, %24, %cst_30 {dimension_numbers = #tpu.dot_dimension_numbers<[1], [0], [0], [1], [0, 0, 1, 1], [], []>} : vector<256x12xf32>, vector<12x4xf32>, vector<256x4xf32> -> vector<256x4xf32>
    %c1_31 = arith.constant 1 : index
    %c0_32 = arith.constant 0 : index
    %c0_33 = arith.constant 0 : index
    %26 = vector.load %arg7[%c1_31, %c0_32, %c0_33] : memref<18x16x12xf32, #tpu.memory_space<vmem>>, vector<16x16x12xf32>
    %27 = vector.shape_cast %26 : vector<16x16x12xf32> to vector<256x12xf32>
    %c1_34 = arith.constant 1 : index
    %c0_35 = arith.constant 0 : index
    %c0_36 = arith.constant 0 : index
    %28 = vector.load %arg3[%c1_34, %c0_35, %c0_36] : memref<3x12x4xf32, #tpu.memory_space<vmem>>, vector<1x12x4xf32>
    %29 = vector.shape_cast %28 : vector<1x12x4xf32> to vector<12x4xf32>
    %cst_37 = arith.constant dense<0.000000e+00> : vector<256x4xf32>
    %30 = tpu.matmul %27, %29, %cst_37 {dimension_numbers = #tpu.dot_dimension_numbers<[1], [0], [0], [1], [0, 0, 1, 1], [], []>} : vector<256x12xf32>, vector<12x4xf32>, vector<256x4xf32> -> vector<256x4xf32>
    %31 = arith.addf %25, %30 : vector<256x4xf32>
    %c2 = arith.constant 2 : index
    %c0_38 = arith.constant 0 : index
    %c0_39 = arith.constant 0 : index
    %32 = vector.load %arg7[%c2, %c0_38, %c0_39] : memref<18x16x12xf32, #tpu.memory_space<vmem>>, vector<16x16x12xf32>
    %33 = vector.shape_cast %32 : vector<16x16x12xf32> to vector<256x12xf32>
    %c2_40 = arith.constant 2 : index
    %c0_41 = arith.constant 0 : index
    %c0_42 = arith.constant 0 : index
    %34 = vector.load %arg3[%c2_40, %c0_41, %c0_42] : memref<3x12x4xf32, #tpu.memory_space<vmem>>, vector<1x12x4xf32>
    %35 = vector.shape_cast %34 : vector<1x12x4xf32> to vector<12x4xf32>
    %cst_43 = arith.constant dense<0.000000e+00> : vector<256x4xf32>
    %36 = tpu.matmul %33, %35, %cst_43 {dimension_numbers = #tpu.dot_dimension_numbers<[1], [0], [0], [1], [0, 0, 1, 1], [], []>} : vector<256x12xf32>, vector<12x4xf32>, vector<256x4xf32> -> vector<256x4xf32>
    %37 = arith.addf %31, %36 : vector<256x4xf32>
    %c1_44 = arith.constant 1 : index
    %c0_45 = arith.constant 0 : index
    %38 = vector.load %arg5[%c1_44, %c0_45] : memref<8x16xf32, #tpu.memory_space<vmem>>, vector<1x4xf32>
    %39 = vector.broadcast %38 : vector<1x4xf32> to vector<256x4xf32>
    %40 = arith.cmpf oge, %37, %39 : vector<256x4xf32>
    %41 = arith.extui %40 : vector<256x4xi1> to vector<256x4xi32>
    %42 = arith.sitofp %41 : vector<256x4xi32> to vector<256x4xf32>
    %c0_46 = arith.constant 0 : index
    %c0_47 = arith.constant 0 : index
    %43 = vector.load %arg4[%c0_46, %c0_47] : memref<4x16xf32, #tpu.memory_space<vmem>>, vector<4x16xf32>
    %cst_48 = arith.constant dense<0.000000e+00> : vector<256x16xf32>
    %44 = tpu.matmul %42, %43, %cst_48 {dimension_numbers = #tpu.dot_dimension_numbers<[1], [0], [0], [1], [0, 0, 1, 1], [], []>} : vector<256x4xf32>, vector<4x16xf32>, vector<256x16xf32> -> vector<256x16xf32>
    %c2_49 = arith.constant 2 : index
    %c0_50 = arith.constant 0 : index
    %45 = vector.load %arg5[%c2_49, %c0_50] : memref<8x16xf32, #tpu.memory_space<vmem>>, vector<1x16xf32>
    %46 = vector.broadcast %45 : vector<1x16xf32> to vector<256x16xf32>
    %47 = arith.cmpf oge, %44, %46 : vector<256x16xf32>
    %48 = arith.extui %47 : vector<256x16xi1> to vector<256x16xi32>
    %49 = arith.sitofp %48 : vector<256x16xi32> to vector<256x16xf32>
    %c0_51 = arith.constant 0 : index
    %c0_52 = arith.constant 0 : index
    %c0_53 = arith.constant 0 : index
    %50 = vector.load %arg1[%c0_51, %c0_52, %c0_53] : memref<1x256x16xf32, #tpu.memory_space<vmem>>, vector<1x256x16xf32>
    %51 = vector.shape_cast %50 : vector<1x256x16xf32> to vector<256x16xf32>
    %52 = arith.addf %49, %51 : vector<256x16xf32>
    %c0_54 = arith.constant 0 : index
    %c0_55 = arith.constant 0 : index
    %c0_56 = arith.constant 0 : index
    %53 = vector.load %arg6[%c0_54, %c0_55, %c0_56] : memref<1x256x16xf32, #tpu.memory_space<vmem>>, vector<1x256x16xf32>
    %54 = vector.shape_cast %53 : vector<1x256x16xf32> to vector<256x16xf32>
    %55 = vector.shape_cast %52 : vector<256x16xf32> to vector<1x256x16xf32>
    tpu.vector_store %arg6[%c0_54, %c0_55, %c0_56], %55 {strides = array<i32>} : memref<1x256x16xf32, #tpu.memory_space<vmem>>, vector<1x256x16xf32>,
    return
  }
  func.func @transform_0(%arg0: i32) -> (i32, i32, i32) {
    %c0_i32 = arith.constant 0 : i32
    %c0_i32_0 = arith.constant 0 : i32
    %c0_i32_1 = arith.constant 0 : i32
    return %arg0, %c0_i32, %c0_i32_0 : i32, i32, i32
  }
  func.func @transform_1(%arg0: i32) -> (i32, i32) {
    %c0_i32 = arith.constant 0 : i32
    %c0_i32_0 = arith.constant 0 : i32
    %c0_i32_1 = arith.constant 0 : i32
    return %c0_i32, %c0_i32_0 : i32, i32
  }
  func.func @transform_2(%arg0: i32) -> (i32, i32, i32) {
    %c0_i32 = arith.constant 0 : i32
    %c0_i32_0 = arith.constant 0 : i32
    %c0_i32_1 = arith.constant 0 : i32
    %c0_i32_2 = arith.constant 0 : i32
    return %c0_i32, %c0_i32_0, %c0_i32_1 : i32, i32, i32
  }
  func.func @transform_3(%arg0: i32) -> (i32, i32) {
    %c0_i32 = arith.constant 0 : i32
    %c0_i32_0 = arith.constant 0 : i32
    %c0_i32_1 = arith.constant 0 : i32
    return %c0_i32, %c0_i32_0 : i32, i32
  }
  func.func @transform_4(%arg0: i32) -> (i32, i32) {
    %c0_i32 = arith.constant 0 : i32
    %c0_i32_0 = arith.constant 0 : i32
    %c0_i32_1 = arith.constant 0 : i32
    return %c0_i32, %c0_i32_0 : i32, i32
  }
  func.func @transform_5(%arg0: i32) -> (i32, i32, i32) {
    %c0_i32 = arith.constant 0 : i32
    %c0_i32_0 = arith.constant 0 : i32
    %c0_i32_1 = arith.constant 0 : i32
    return %arg0, %c0_i32, %c0_i32_0 : i32, i32, i32
  }
}

</mosaic_0001>

<llo_original>
// kernel: tpu_custom_call.1
$region0: #{tpu_custom_call.1}
  #allocation0 [shape = 'u32[]', space=smem, size = 0x4, offset = 0x4, fixed_abs, tag = 'smem constant byte address 0x4 - core index']
  #allocation1 [shape = 'u32[144,128]{1,0:T(1,128)}', space=vmem, size = 0x12000, scoped, tag = 'internal scratch']
  #allocation2 [shape = 'f32[18,16,12]{2,1,0:T(8,128)}', space=vmem, size = 0x24000, scoped, tag = 'scratch operand']
  %s0 = inlined_call_operand.vmem [shape: f32[2,256,16], index: 0, kind: input, shape index: {}]
  %s1 = inlined_call_operand.vmem [shape: f32[16,4], index: 1, kind: input, shape index: {}]
  %s2 = inlined_call_operand.vmem [shape: f32[3,12,4], index: 2, kind: input, shape index: {}]
  %s3 = inlined_call_operand.vmem [shape: f32[4,16], index: 3, kind: input, shape index: {}]
  %s4 = inlined_call_operand.vmem [shape: f32[8,16], index: 4, kind: input, shape index: {}]
  %s5 = inlined_call_operand.vmem [shape: f32[2,256,16], index: 5, kind: output, shape index: {}]
  %s6 = sld [smem:[#allocation0]]
  $region53: #{tpu_custom_call.1} parent=0
    _
  %s8 = ssub.s32 1, %s6
  %s9 = scalar_select 0, %s8, %s6
  loop: start=0, step=1, limit=4
  $region2: #{tpu_custom_call.1} parent=0 // loop_pre_header
    _
  $region3: #{tpu_custom_call.1} parent=0 // loop_header
    %s11 = sphi 0, %s15
    %p12 = scmp.ge.s32.totalorder %s11, 4
    %s21 = sphi 0, %s23
    %s24 = sphi 0, %s21
    %s25 = sphi 0, %s24
    %s41 = sphi 0, %s25
    %s45 = sphi 0, %s45
    %s47 = sphi 0, %s45
    %s48 = sphi 0, %s47
    %s62 = sphi 0, %s48
    %s66 = sphi 0, %s66
    %s68 = sphi 0, %s66
    %s69 = sphi 0, %s68
    %s83 = sphi 0, %s69
    %s87 = sphi 0, %s87
    %s89 = sphi 0, %s87
    %s90 = sphi 0, %s89
    %s104 = sphi 0, %s90
    %s108 = sphi 0, %s108
    %s110 = sphi 0, %s108
    %s111 = sphi 0, %s110
    %s125 = sphi 0, %s111
    %s131 = sphi 0, %s133
    %s134 = sphi 0, %s131
    %s135 = sphi 0, %s134
    %s151 = sphi 0, %s135
  $region4: #{tpu_custom_call.1} parent=0 // loop_header_branch
    %14 = sbr.rel (%p12) target = $region8
  $region5: #{tpu_custom_call.1} parent=0 // loop_body
    %s16 = ssub.s32 %s11, 1
    %s17 = ssub.s32 %s11, 2
    %s18 = sadd.s32 %s11, 1
    %s19 = ssub.s32 %s11, %s18
    %p20 = scmp.eq.s32.totalorder %s19, 0
    %s22 = sadd.s32 %s21, 1
    %s23 = scalar_select %p20, %s21, %s22
    %p26 = pneg %p20
    %p27 = scmp.eq.s32.totalorder %s11, 1
    %p28 = por %p26, %p27
    %p29 = scmp.ne.s32.totalorder %s21, %s24
    %p30 = scmp.eq.s32.totalorder %s11, 0
    %p31 = por %p29, %p30
    %p32 = scmp.ne.s32.totalorder %s21, %s24
    %p33 = scmp.eq.s32.totalorder %s16, 1
    %p34 = por %p32, %p33
    %p35 = scmp.ne.s32.totalorder %s24, %s25
    %p36 = scmp.eq.s32.totalorder %s16, 0
    %p37 = por %p35, %p36
    %p38 = scmp.ne.s32.totalorder %s24, %s25
    %p39 = scmp.eq.s32.totalorder %s17, 1
    %p40 = por %p38, %p39
    %p42 = scmp.ne.s32.totalorder %s25, %s41
    %p43 = scmp.eq.s32.totalorder %s17, 0
    %p44 = por %p42, %p43
    %s46 = sadd.s32 %s45, 1
    %p49 = scmp.eq.s32.totalorder %s11, 1
    %p50 = scmp.ne.s32.totalorder %s45, %s47
    %p51 = scmp.eq.s32.totalorder %s11, 0
    %p52 = por %p50, %p51
    %p53 = scmp.ne.s32.totalorder %s45, %s47
    %p54 = scmp.eq.s32.totalorder %s16, 1
    %p55 = por %p53, %p54
    %p56 = scmp.ne.s32.totalorder %s47, %s48
    %p57 = scmp.eq.s32.totalorder %s16, 0
    %p58 = por %p56, %p57
    %p59 = scmp.ne.s32.totalorder %s47, %s48
    %p60 = scmp.eq.s32.totalorder %s17, 1
    %p61 = por %p59, %p60
    %p63 = scmp.ne.s32.totalorder %s48, %s62
    %p64 = scmp.eq.s32.totalorder %s17, 0
    %p65 = por %p63, %p64
    %s67 = sadd.s32 %s66, 1
    %p70 = scmp.eq.s32.totalorder %s11, 1
    %p71 = scmp.ne.s32.totalorder %s66, %s68
    %p72 = scmp.eq.s32.totalorder %s11, 0
    %p73 = por %p71, %p72
    %p74 = scmp.ne.s32.totalorder %s66, %s68
    %p75 = scmp.eq.s32.totalorder %s16, 1
    %p76 = por %p74, %p75
    %p77 = scmp.ne.s32.totalorder %s68, %s69
    %p78 = scmp.eq.s32.totalorder %s16, 0
    %p79 = por %p77, %p78
    %p80 = scmp.ne.s32.totalorder %s68, %s69
    %p81 = scmp.eq.s32.totalorder %s17, 1
    %p82 = por %p80, %p81
    %p84 = scmp.ne.s32.totalorder %s69, %s83
    %p85 = scmp.eq.s32.totalorder %s17, 0
    %p86 = por %p84, %p85
    %s88 = sadd.s32 %s87, 1
    %p91 = scmp.eq.s32.totalorder %s11, 1
    %p92 = scmp.ne.s32.totalorder %s87, %s89
    %p93 = scmp.eq.s32.totalorder %s11, 0
    %p94 = por %p92, %p93
    %p95 = scmp.ne.s32.totalorder %s87, %s89
    %p96 = scmp.eq.s32.totalorder %s16, 1
    %p97 = por %p95, %p96
    %p98 = scmp.ne.s32.totalorder %s89, %s90
    %p99 = scmp.eq.s32.totalorder %s16, 0
    %p100 = por %p98, %p99
    %p101 = scmp.ne.s32.totalorder %s89, %s90
    %p102 = scmp.eq.s32.totalorder %s17, 1
    %p103 = por %p101, %p102
    %p105 = scmp.ne.s32.totalorder %s90, %s104
    %p106 = scmp.eq.s32.totalorder %s17, 0
    %p107 = por %p105, %p106
    %s109 = sadd.s32 %s108, 1
    %p112 = scmp.eq.s32.totalorder %s11, 1
    %p113 = scmp.ne.s32.totalorder %s108, %s110
    %p114 = scmp.eq.s32.totalorder %s11, 0
    %p115 = por %p113, %p114
    %p116 = scmp.ne.s32.totalorder %s108, %s110
    %p117 = scmp.eq.s32.totalorder %s16, 1
    %p118 = por %p116, %p117
    %p119 = scmp.ne.s32.totalorder %s110, %s111
    %p120 = scmp.eq.s32.totalorder %s16, 0
    %p121 = por %p119, %p120
    %p122 = scmp.ne.s32.totalorder %s110, %s111
    %p123 = scmp.eq.s32.totalorder %s17, 1
    %p124 = por %p122, %p123
    %p126 = scmp.ne.s32.totalorder %s111, %s125
    %p127 = scmp.eq.s32.totalorder %s17, 0
    %p128 = por %p126, %p127
    %s129 = ssub.s32 %s11, %s18
    %p130 = scmp.eq.s32.totalorder %s129, 0
    %s132 = sadd.s32 %s131, 1
    %s133 = scalar_select %p130, %s131, %s132
    %p136 = pneg %p130
    %p137 = scmp.eq.s32.totalorder %s11, 1
    %p138 = por %p136, %p137
    %p139 = scmp.ne.s32.totalorder %s131, %s134
    %p140 = scmp.eq.s32.totalorder %s11, 0
    %p141 = por %p139, %p140
    %p142 = scmp.ne.s32.totalorder %s131, %s134
    %p143 = scmp.eq.s32.totalorder %s16, 1
    %p144 = por %p142, %p143
    %p145 = scmp.ne.s32.totalorder %s134, %s135
    %p146 = scmp.eq.s32.totalorder %s16, 0
    %p147 = por %p145, %p146
    %p148 = scmp.ne.s32.totalorder %s134, %s135
    %p149 = scmp.eq.s32.totalorder %s17, 1
    %p150 = por %p148, %p149
    %p152 = scmp.ne.s32.totalorder %s135, %s151
    %p153 = scmp.eq.s32.totalorder %s17, 0
    %p154 = por %p152, %p153
    %p155 = scmp.le.s32.totalorder 1, %s11
    %p156 = scmp.lt.s32.totalorder %s11, 3
    %p157 = pnand %p155, %p156
    %p158 = pneg %p157
    // Predicated region
    $region9: #{tpu_custom_call.1} parent=5 // pred_check
      _
    $region10: #{tpu_custom_call.1} parent=5 // pred_check_branch
      %160 = sbr.rel (%p157) target = $region12
    $region11: #{tpu_custom_call.1} parent=5 // pred_region
      %s161 = ssub.s32 %s11, 1
      // Predicated region
      $region13: #{tpu_custom_call.1} parent=11 // pred_check
        %p162 = pneg %p58
      $region14: #{tpu_custom_call.1} parent=11 // pred_check_branch
        %164 = sbr.rel (%p162) target = $region16
      $region15: #{tpu_custom_call.1} parent=11 // pred_region
        _
      $region16: #{tpu_custom_call.1} parent=11 // pred_fallthru
        _
      // Predicated region
      $region17: #{tpu_custom_call.1} parent=11 // pred_check
        %p165 = pneg %p79
      $region18: #{tpu_custom_call.1} parent=11 // pred_check_branch
        %167 = sbr.rel (%p165) target = $region20
      $region19: #{tpu_custom_call.1} parent=11 // pred_region
        _
      $region20: #{tpu_custom_call.1} parent=11 // pred_fallthru
        _
      // Predicated region
      $region21: #{tpu_custom_call.1} parent=11 // pred_check
        %p168 = pneg %p100
      $region22: #{tpu_custom_call.1} parent=11 // pred_check_branch
        %170 = sbr.rel (%p168) target = $region24
      $region23: #{tpu_custom_call.1} parent=11 // pred_region
        _
      $region24: #{tpu_custom_call.1} parent=11 // pred_fallthru
        _
      // Predicated region
      $region25: #{tpu_custom_call.1} parent=11 // pred_check
        %p171 = pneg %p121
      $region26: #{tpu_custom_call.1} parent=11 // pred_check_branch
        %173 = sbr.rel (%p171) target = $region28
      $region27: #{tpu_custom_call.1} parent=11 // pred_region
        _
      $region28: #{tpu_custom_call.1} parent=11 // pred_fallthru
        _
    $region12: #{tpu_custom_call.1} parent=5 // pred_fallthru
      _
    %p174 = scmp.lt.s32.totalorder %s11, 2
    // Predicated region
    $region29: #{tpu_custom_call.1} parent=5 // pred_check
      %p175 = pneg %p174
    $region30: #{tpu_custom_call.1} parent=5 // pred_check_branch
      %177 = sbr.rel (%p175) target = $region32
    $region31: #{tpu_custom_call.1} parent=5 // pred_region
      // Predicated region
      $region33: #{tpu_custom_call.1} parent=31 // pred_check
        %p178 = pneg %p31
      $region34: #{tpu_custom_call.1} parent=31 // pred_check_branch
        %180 = sbr.rel (%p178) target = $region36
      $region35: #{tpu_custom_call.1} parent=31 // pred_region
        %p181 = scmp.lt.s32.totalorder %s11, 1
        %s182 = scalar_select %p181, %s11, 1
        %s183 = smul.addr %s182, 32
        %s184 = smul.addr %s183, 8
        %s185 = scalar_lea.vmem %s0, %s184
      $region36: #{tpu_custom_call.1} parent=31 // pred_fallthru
        _
    $region32: #{tpu_custom_call.1} parent=5 // pred_fallthru
      _
    %p186 = scmp.le.s32.totalorder 1, %s11
    %p187 = scmp.lt.s32.totalorder %s11, 3
    %p188 = pnand %p186, %p187
    %p189 = pneg %p188
    // Predicated region
    $region37: #{tpu_custom_call.1} parent=5 // pred_check
      _
    $region38: #{tpu_custom_call.1} parent=5 // pred_check_branch
      %191 = sbr.rel (%p188) target = $region40
    $region39: #{tpu_custom_call.1} parent=5 // pred_region
      %s192 = ssub.s32 %s11, 1
      %p193 = scmp.lt.s32.totalorder %s16, 1
      %s194 = scalar_select %p193, %s16, 1
      %s195 = smul.addr %s194, 32
      %s196 = smul.addr %s195, 8
      %s197 = scalar_lea.vmem %s0, %s196
      %p198 = pneg %p37
      %p199 = pneg %p34
      %p200 = pneg %p58
      %p201 = pneg %p55
      %p202 = pneg %p79
      %p203 = pneg %p76
      %p204 = pneg %p100
      %p205 = pneg %p97
      %p206 = pneg %p121
      %p207 = pneg %p118
      %p208 = pneg %p147
      %p209 = pneg %p144
      %p210 = scmp.lt.s32.totalorder %s16, 1
      %s211 = scalar_select %p210, %s16, 1
      %s212 = smul.addr %s211, 32
      %s213 = smul.addr %s212, 8
      %s214 = scalar_lea.vmem %s5, %s213
      %p215 = scmp.lt.s32.totalorder %s16, 1
      %s216 = scalar_select %p215, %s16, 1
      %s217 = smul.addr %s216, 32
      %s218 = smul.addr %s217, 8
      %s219 = scalar_lea.vmem %s0, %s218
      %p220 = scmp.lt.s32.totalorder %s16, 1
      %s221 = scalar_select %p220, %s16, 1
      %s222 = smul.addr %s221, 32
      %s223 = smul.addr %s222, 8
      %s224 = scalar_lea.vmem %s5, %s223
      %v225 = vld [vmem:[%s219] sm:$0xff]
      %v226 = vld [vmem:[%s219 + $0x8] sm:$0xff]
      %v227 = vld [vmem:[%s219 + $0x10] sm:$0xff]
      %v228 = vld [vmem:[%s219 + $0x18] sm:$0xff]
      %v229 = vld [vmem:[%s219 + $0x20] sm:$0xff]
      %v230 = vld [vmem:[%s219 + $0x28] sm:$0xff]
      %v231 = vld [vmem:[%s219 + $0x30] sm:$0xff]
      %v232 = vld [vmem:[%s219 + $0x38] sm:$0xff]
      %v233 = vld [vmem:[%s219 + $0x40] sm:$0xff]
      %v234 = vld [vmem:[%s219 + $0x48] sm:$0xff]
      %v235 = vld [vmem:[%s219 + $0x50] sm:$0xff]
      %v236 = vld [vmem:[%s219 + $0x58] sm:$0xff]
      %v237 = vld [vmem:[%s219 + $0x60] sm:$0xff]
      %v238 = vld [vmem:[%s219 + $0x68] sm:$0xff]
      %v239 = vld [vmem:[%s219 + $0x70] sm:$0xff]
      %v240 = vld [vmem:[%s219 + $0x78] sm:$0xff]
      %v241 = vld [vmem:[%s219 + $0x80] sm:$0xff]
      %v242 = vld [vmem:[%s219 + $0x88] sm:$0xff]
      %v243 = vld [vmem:[%s219 + $0x90] sm:$0xff]
      %v244 = vld [vmem:[%s219 + $0x98] sm:$0xff]
      %v245 = vld [vmem:[%s219 + $0xa0] sm:$0xff]
      %v246 = vld [vmem:[%s219 + $0xa8] sm:$0xff]
      %v247 = vld [vmem:[%s219 + $0xb0] sm:$0xff]
      %v248 = vld [vmem:[%s219 + $0xb8] sm:$0xff]
      %v249 = vld [vmem:[%s219 + $0xc0] sm:$0xff]
      %v250 = vld [vmem:[%s219 + $0xc8] sm:$0xff]
      %v251 = vld [vmem:[%s219 + $0xd0] sm:$0xff]
      %v252 = vld [vmem:[%s219 + $0xd8] sm:$0xff]
      %v253 = vld [vmem:[%s219 + $0xe0] sm:$0xff]
      %v254 = vld [vmem:[%s219 + $0xe8] sm:$0xff]
      %v255 = vld [vmem:[%s219 + $0xf0] sm:$0xff]
      %v256 = vld [vmem:[%s219 + $0xf8] sm:$0xff]
      %v257 = vld [vmem:[%s1] sm:$0xff]
      %v258 = vld [vmem:[%s1 + $0x8] sm:$0xff]
      %vm259 = vcmask 130048
      %v261 = vsel %vm259, %v225, 0
      %v264 = vsel %vm259, %v226, 0
      %v267 = vsel %vm259, %v227, 0
      %v270 = vsel %vm259, %v228, 0
      %v273 = vsel %vm259, %v229, 0
      %v276 = vsel %vm259, %v230, 0
      %v279 = vsel %vm259, %v231, 0
      %v282 = vsel %vm259, %v232, 0
      %v285 = vsel %vm259, %v233, 0
      %v288 = vsel %vm259, %v234, 0
      %v291 = vsel %vm259, %v235, 0
      %v294 = vsel %vm259, %v236, 0
      %v297 = vsel %vm259, %v237, 0
      %v300 = vsel %vm259, %v238, 0
      %v303 = vsel %vm259, %v239, 0
      %v306 = vsel %vm259, %v240, 0
      %v309 = vsel %vm259, %v241, 0
      %v312 = vsel %vm259, %v242, 0
      %v315 = vsel %vm259, %v243, 0
      %v318 = vsel %vm259, %v244, 0
      %v321 = vsel %vm259, %v245, 0
      %v324 = vsel %vm259, %v246, 0
      %v327 = vsel %vm259, %v247, 0
      %v330 = vsel %vm259, %v248, 0
      %v333 = vsel %vm259, %v249, 0
      %v336 = vsel %vm259, %v250, 0
      %v339 = vsel %vm259, %v251, 0
      %v342 = vsel %vm259, %v252, 0
      %v345 = vsel %vm259, %v253, 0
      %v348 = vsel %vm259, %v254, 0
      %v351 = vsel %vm259, %v255, 0
      %v354 = vsel %vm259, %v256, 0
      %356 = vmatprep.subr.mxu0 0.0
      %357 = vmatpush1.msra.mxu0 %v257
      %358 = vmatprep.subr.mxu0 0.0
      %359 = vmatpush1.msra.mxu0 %v258
      %360 = vmatprep.subr.mxu0 0.0
      %361 = vmatpush1.msra.mxu0 0.0
      %362 = vmatprep.subr.mxu0 0.0
      %363 = vmatpush1.msra.mxu0 0.0
      %364 = vmatprep.subr.mxu0 0.0
      %365 = vmatpush1.msra.mxu0 0.0
      %366 = vmatprep.subr.mxu0 0.0
      %367 = vmatpush1.msra.mxu0 0.0
      %368 = vmatprep.subr.mxu0 0.0
      %369 = vmatpush1.msra.mxu0 0.0
      %370 = vmatprep.subr.mxu0 0.0
      %371 = vmatpush1.msra.mxu0 0.0
      %372 = vmatprep.subr.mxu0 0.0
      %373 = vmatpush1.msra.mxu0 0.0
      %374 = vmatprep.subr.mxu0 0.0
      %375 = vmatpush1.msra.mxu0 0.0
      %376 = vmatprep.subr.mxu0 0.0
      %377 = vmatpush1.msra.mxu0 0.0
      %378 = vmatprep.subr.mxu0 0.0
      %379 = vmatpush1.msra.mxu0 0.0
      %380 = vmatprep.subr.mxu0 0.0
      %381 = vmatpush1.msra.mxu0 0.0
      %382 = vmatprep.subr.mxu0 0.0
      %383 = vmatpush1.msra.mxu0 0.0
      %384 = vmatprep.subr.mxu0 0.0
      %385 = vmatpush1.msra.mxu0 0.0
      %386 = vmatprep.subr.mxu0 0.0
      %387 = vmatpush1.msra.mxu0 0.0
      %388 = vmatprep.subr.mxu0 0.0
      %389 = vmatpush1.msra.mxu0 0.0
      %390 = vmatprep.subr.mxu0 0.0
      %391 = vmatpush1.msra.mxu0 0.0
      %392 = vmatprep.subr.mxu0 0.0
      %393 = vmatpush1.msra.mxu0 0.0
      %394 = vmatprep.subr.mxu0 0.0
      %395 = vmatpush1.msra.mxu0 0.0
      %396 = vmatprep.subr.mxu0 0.0
      %397 = vmatpush1.msra.mxu0 0.0
      %398 = vmatprep.subr.mxu0 0.0
      %399 = vmatpush1.msra.mxu0 0.0
      %400 = vmatprep.subr.mxu0 0.0
      %401 = vmatpush1.msra.mxu0 0.0
      %402 = vmatprep.subr.mxu0 0.0
      %403 = vmatpush1.msra.mxu0 0.0
      %404 = vmatprep.subr.mxu0 0.0
      %405 = vmatpush1.msra.mxu0 0.0
      %406 = vmatprep.subr.mxu0 0.0
      %407 = vmatpush1.msra.mxu0 0.0
      %408 = vmatprep.subr.mxu0 0.0
      %409 = vmatpush1.msra.mxu0 0.0
      %410 = vmatprep.subr.mxu0 0.0
      %411 = vmatpush1.msra.mxu0 0.0
      %412 = vmatprep.subr.mxu0 0.0
      %413 = vmatpush1.msra.mxu0 0.0
      %414 = vmatprep.subr.mxu0 0.0
      %415 = vmatpush1.msra.mxu0 0.0
      %416 = vmatprep.subr.mxu0 0.0
      %417 = vmatpush1.msra.mxu0 0.0
      %418 = vmatprep.subr.mxu0 0.0
      %419 = vmatpush1.msra.mxu0 0.0
      %420 = vmatprep.mubr.f32.mxu0 0.0
      %421 = vmatmul.mubr.f32.gmra.mrb[0].mxu0 %v261
      %v422 = vpop.f32.mrb[0].mxu0
      %v423 = vadd.f32 0.0, %v422
      %v424 = vpop.f32.mrb[0].mxu0
      %425 = vmatprep.mubr.f32.mxu0 0.0
      %426 = vmatmul.mubr.f32.gmra.mrb[0].mxu0 %v264
      %v427 = vpop.f32.mrb[0].mxu0
      %v428 = vadd.f32 0.0, %v427
      %v429 = vpop.f32.mrb[0].mxu0
      %430 = vmatprep.mubr.f32.mxu0 0.0
      %431 = vmatmul.mubr.f32.gmra.mrb[0].mxu0 %v267
      %v432 = vpop.f32.mrb[0].mxu0
      %v433 = vadd.f32 0.0, %v432
      %v434 = vpop.f32.mrb[0].mxu0
      %435 = vmatprep.mubr.f32.mxu0 0.0
      %436 = vmatmul.mubr.f32.gmra.mrb[0].mxu0 %v270
      %v437 = vpop.f32.mrb[0].mxu0
      %v438 = vadd.f32 0.0, %v437
      %v439 = vpop.f32.mrb[0].mxu0
      %440 = vmatprep.mubr.f32.mxu0 0.0
      %441 = vmatmul.mubr.f32.gmra.mrb[0].mxu0 %v273
      %v442 = vpop.f32.mrb[0].mxu0
      %v443 = vadd.f32 0.0, %v442
      %v444 = vpop.f32.mrb[0].mxu0
      %445 = vmatprep.mubr.f32.mxu0 0.0
      %446 = vmatmul.mubr.f32.gmra.mrb[0].mxu0 %v276
      %v447 = vpop.f32.mrb[0].mxu0
      %v448 = vadd.f32 0.0, %v447
      %v449 = vpop.f32.mrb[0].mxu0
      %450 = vmatprep.mubr.f32.mxu0 0.0
      %451 = vmatmul.mubr.f32.gmra.mrb[0].mxu0 %v279
      %v452 = vpop.f32.mrb[0].mxu0
      %v453 = vadd.f32 0.0, %v452
      %v454 = vpop.f32.mrb[0].mxu0
      %455 = vmatprep.mubr.f32.mxu0 0.0
      %456 = vmatmul.mubr.f32.gmra.mrb[0].mxu0 %v282
      %v457 = vpop.f32.mrb[0].mxu0
      %v458 = vadd.f32 0.0, %v457
      %v459 = vpop.f32.mrb[0].mxu0
      %460 = vmatprep.mubr.f32.mxu0 0.0
      %461 = vmatmul.mubr.f32.gmra.mrb[0].mxu0 %v285
      %v462 = vpop.f32.mrb[0].mxu0
      %v463 = vadd.f32 0.0, %v462
      %v464 = vpop.f32.mrb[0].mxu0
      %465 = vmatprep.mubr.f32.mxu0 0.0
      %466 = vmatmul.mubr.f32.gmra.mrb[0].mxu0 %v288
      %v467 = vpop.f32.mrb[0].mxu0
      %v468 = vadd.f32 0.0, %v467
      %v469 = vpop.f32.mrb[0].mxu0
      %470 = vmatprep.mubr.f32.mxu0 0.0
      %471 = vmatmul.mubr.f32.gmra.mrb[0].mxu0 %v291
      %v472 = vpop.f32.mrb[0].mxu0
      %v473 = vadd.f32 0.0, %v472
      %v474 = vpop.f32.mrb[0].mxu0
      %475 = vmatprep.mubr.f32.mxu0 0.0
      %476 = vmatmul.mubr.f32.gmra.mrb[0].mxu0 %v294
      %v477 = vpop.f32.mrb[0].mxu0
      %v478 = vadd.f32 0.0, %v477
      %v479 = vpop.f32.mrb[0].mxu0
      %480 = vmatprep.mubr.f32.mxu0 0.0
      %481 = vmatmul.mubr.f32.gmra.mrb[0].mxu0 %v297
      %v482 = vpop.f32.mrb[0].mxu0
      %v483 = vadd.f32 0.0, %v482
      %v484 = vpop.f32.mrb[0].mxu0
      %485 = vmatprep.mubr.f32.mxu0 0.0
      %486 = vmatmul.mubr.f32.gmra.mrb[0].mxu0 %v300
      %v487 = vpop.f32.mrb[0].mxu0
      %v488 = vadd.f32 0.0, %v487
      %v489 = vpop.f32.mrb[0].mxu0
      %490 = vmatprep.mubr.f32.mxu0 0.0
      %491 = vmatmul.mubr.f32.gmra.mrb[0].mxu0 %v303
      %v492 = vpop.f32.mrb[0].mxu0
      %v493 = vadd.f32 0.0, %v492
      %v494 = vpop.f32.mrb[0].mxu0
      %495 = vmatprep.mubr.f32.mxu0 0.0
      %496 = vmatmul.mubr.f32.gmra.mrb[0].mxu0 %v306
      %v497 = vpop.f32.mrb[0].mxu0
      %v498 = vadd.f32 0.0, %v497
      %v499 = vpop.f32.mrb[0].mxu0
      %500 = vmatprep.mubr.f32.mxu0 0.0
      %501 = vmatmul.mubr.f32.gmra.mrb[0].mxu0 %v309
      %v502 = vpop.f32.mrb[0].mxu0
      %v503 = vadd.f32 0.0, %v502
      %v504 = vpop.f32.mrb[0].mxu0
      %505 = vmatprep.mubr.f32.mxu0 0.0
      %506 = vmatmul.mubr.f32.gmra.mrb[0].mxu0 %v312
      %v507 = vpop.f32.mrb[0].mxu0
      %v508 = vadd.f32 0.0, %v507
      %v509 = vpop.f32.mrb[0].mxu0
      %510 = vmatprep.mubr.f32.mxu0 0.0
      %511 = vmatmul.mubr.f32.gmra.mrb[0].mxu0 %v315
      %v512 = vpop.f32.mrb[0].mxu0
      %v513 = vadd.f32 0.0, %v512
      %v514 = vpop.f32.mrb[0].mxu0
      %515 = vmatprep.mubr.f32.mxu0 0.0
      %516 = vmatmul.mubr.f32.gmra.mrb[0].mxu0 %v318
      %v517 = vpop.f32.mrb[0].mxu0
      %v518 = vadd.f32 0.0, %v517
      %v519 = vpop.f32.mrb[0].mxu0
      %520 = vmatprep.mubr.f32.mxu0 0.0
      %521 = vmatmul.mubr.f32.gmra.mrb[0].mxu0 %v321
      %v522 = vpop.f32.mrb[0].mxu0
      %v523 = vadd.f32 0.0, %v522
      %v524 = vpop.f32.mrb[0].mxu0
      %525 = vmatprep.mubr.f32.mxu0 0.0
      %526 = vmatmul.mubr.f32.gmra.mrb[0].mxu0 %v324
      %v527 = vpop.f32.mrb[0].mxu0
      %v528 = vadd.f32 0.0, %v527
      %v529 = vpop.f32.mrb[0].mxu0
      %530 = vmatprep.mubr.f32.mxu0 0.0
      %531 = vmatmul.mubr.f32.gmra.mrb[0].mxu0 %v327
      %v532 = vpop.f32.mrb[0].mxu0
      %v533 = vadd.f32 0.0, %v532
      %v534 = vpop.f32.mrb[0].mxu0
      %535 = vmatprep.mubr.f32.mxu0 0.0
      %536 = vmatmul.mubr.f32.gmra.mrb[0].mxu0 %v330
      %v537 = vpop.f32.mrb[0].mxu0
      %v538 = vadd.f32 0.0, %v537
      %v539 = vpop.f32.mrb[0].mxu0
      %540 = vmatprep.mubr.f32.mxu0 0.0
      %541 = vmatmul.mubr.f32.gmra.mrb[0].mxu0 %v333
      %v542 = vpop.f32.mrb[0].mxu0
      %v543 = vadd.f32 0.0, %v542
      %v544 = vpop.f32.mrb[0].mxu0
      %545 = vmatprep.mubr.f32.mxu0 0.0
      %546 = vmatmul.mubr.f32.gmra.mrb[0].mxu0 %v336
      %v547 = vpop.f32.mrb[0].mxu0
      %v548 = vadd.f32 0.0, %v547
      %v549 = vpop.f32.mrb[0].mxu0
      %550 = vmatprep.mubr.f32.mxu0 0.0
      %551 = vmatmul.mubr.f32.gmra.mrb[0].mxu0 %v339
      %v552 = vpop.f32.mrb[0].mxu0
      %v553 = vadd.f32 0.0, %v552
      %v554 = vpop.f32.mrb[0].mxu0
      %555 = vmatprep.mubr.f32.mxu0 0.0
      %556 = vmatmul.mubr.f32.gmra.mrb[0].mxu0 %v342
      %v557 = vpop.f32.mrb[0].mxu0
      %v558 = vadd.f32 0.0, %v557
      %v559 = vpop.f32.mrb[0].mxu0
      %560 = vmatprep.mubr.f32.mxu0 0.0
      %561 = vmatmul.mubr.f32.gmra.mrb[0].mxu0 %v345
      %v562 = vpop.f32.mrb[0].mxu0
      %v563 = vadd.f32 0.0, %v562
      %v564 = vpop.f32.mrb[0].mxu0
      %565 = vmatprep.mubr.f32.mxu0 0.0
      %566 = vmatmul.mubr.f32.gmra.mrb[0].mxu0 %v348
      %v567 = vpop.f32.mrb[0].mxu0
      %v568 = vadd.f32 0.0, %v567
      %v569 = vpop.f32.mrb[0].mxu0
      %570 = vmatprep.mubr.f32.mxu0 0.0
      %571 = vmatmul.mubr.f32.gmra.mrb[0].mxu0 %v351
      %v572 = vpop.f32.mrb[0].mxu0
      %v573 = vadd.f32 0.0, %v572
      %v574 = vpop.f32.mrb[0].mxu0
      %575 = vmatprep.mubr.f32.mxu0 0.0
      %576 = vmatmul.mubr.f32.gmra.mrb[0].mxu0 %v354
      %v577 = vpop.f32.mrb[0].mxu0
      %v578 = vadd.f32 0.0, %v577
      %v579 = vpop.f32.mrb[0].mxu0
      %580 = vdwg.mxu0
      %v581 = vld [vmem:[%s4] sm:$0x1]
      %v582 = vlaneseq
      %v583 = vshrl.u32 %v582, 7
      %v584 = vsub.s32 0, %v583
      %v585 = vrot.slane %v581, %v584
      %vm586 = vcmp.ge.f32.partialorder %v423, %v585
      %vm587 = vcmp.ge.f32.partialorder %v428, %v585
      %vm588 = vcmp.ge.f32.partialorder %v433, %v585
      %vm589 = vcmp.ge.f32.partialorder %v438, %v585
      %vm590 = vcmp.ge.f32.partialorder %v443, %v585
      %vm591 = vcmp.ge.f32.partialorder %v448, %v585
      %vm592 = vcmp.ge.f32.partialorder %v453, %v585
      %vm593 = vcmp.ge.f32.partialorder %v458, %v585
      %vm594 = vcmp.ge.f32.partialorder %v463, %v585
      %vm595 = vcmp.ge.f32.partialorder %v468, %v585
      %vm596 = vcmp.ge.f32.partialorder %v473, %v585
      %vm597 = vcmp.ge.f32.partialorder %v478, %v585
      %vm598 = vcmp.ge.f32.partialorder %v483, %v585
      %vm599 = vcmp.ge.f32.partialorder %v488, %v585
      %vm600 = vcmp.ge.f32.partialorder %v493, %v585
      %vm601 = vcmp.ge.f32.partialorder %v498, %v585
      %vm602 = vcmp.ge.f32.partialorder %v503, %v585
      %vm603 = vcmp.ge.f32.partialorder %v508, %v585
      %vm604 = vcmp.ge.f32.partialorder %v513, %v585
      %vm605 = vcmp.ge.f32.partialorder %v518, %v585
      %vm606 = vcmp.ge.f32.partialorder %v523, %v585
      %vm607 = vcmp.ge.f32.partialorder %v528, %v585
      %vm608 = vcmp.ge.f32.partialorder %v533, %v585
      %vm609 = vcmp.ge.f32.partialorder %v538, %v585
      %vm610 = vcmp.ge.f32.partialorder %v543, %v585
      %vm611 = vcmp.ge.f32.partialorder %v548, %v585
      %vm612 = vcmp.ge.f32.partialorder %v553, %v585
      %vm613 = vcmp.ge.f32.partialorder %v558, %v585
      %vm614 = vcmp.ge.f32.partialorder %v563, %v585
      %vm615 = vcmp.ge.f32.partialorder %v568, %v585
      %vm616 = vcmp.ge.f32.partialorder %v573, %v585
      %vm617 = vcmp.ge.f32.partialorder %v578, %v585
      %v618 = vsel %vm586, 1, 0
      %v619 = vsel %vm587, 1, 0
      %v620 = vsel %vm588, 1, 0
      %v621 = vsel %vm589, 1, 0
      %v622 = vsel %vm590, 1, 0
      %v623 = vsel %vm591, 1, 0
      %v624 = vsel %vm592, 1, 0
      %v625 = vsel %vm593, 1, 0
      %v626 = vsel %vm594, 1, 0
      %v627 = vsel %vm595, 1, 0
      %v628 = vsel %vm596, 1, 0
      %v629 = vsel %vm597, 1, 0
      %v630 = vsel %vm598, 1, 0
      %v631 = vsel %vm599, 1, 0
      %v632 = vsel %vm600, 1, 0
      %v633 = vsel %vm601, 1, 0
      %v634 = vsel %vm602, 1, 0
      %v635 = vsel %vm603, 1, 0
      %v636 = vsel %vm604, 1, 0
      %v637 = vsel %vm605, 1, 0
      %v638 = vsel %vm606, 1, 0
      %v639 = vsel %vm607, 1, 0
      %v640 = vsel %vm608, 1, 0
      %v641 = vsel %vm609, 1, 0
      %v642 = vsel %vm610, 1, 0
      %v643 = vsel %vm611, 1, 0
      %v644 = vsel %vm612, 1, 0
      %v645 = vsel %vm613, 1, 0
      %v646 = vsel %vm614, 1, 0
      %v647 = vsel %vm615, 1, 0
      %v648 = vsel %vm616, 1, 0
      %v649 = vsel %vm617, 1, 0
      %v650 = vcvt.s32.f32 %v618
      %v651 = vcvt.s32.f32 %v619
      %v652 = vcvt.s32.f32 %v620
      %v653 = vcvt.s32.f32 %v621
      %v654 = vcvt.s32.f32 %v622
      %v655 = vcvt.s32.f32 %v623
      %v656 = vcvt.s32.f32 %v624
      %v657 = vcvt.s32.f32 %v625
      %v658 = vcvt.s32.f32 %v626
      %v659 = vcvt.s32.f32 %v627
      %v660 = vcvt.s32.f32 %v628
      %v661 = vcvt.s32.f32 %v629
      %v662 = vcvt.s32.f32 %v630
      %v663 = vcvt.s32.f32 %v631
      %v664 = vcvt.s32.f32 %v632
      %v665 = vcvt.s32.f32 %v633
      %v666 = vcvt.s32.f32 %v634
      %v667 = vcvt.s32.f32 %v635
      %v668 = vcvt.s32.f32 %v636
      %v669 = vcvt.s32.f32 %v637
      %v670 = vcvt.s32.f32 %v638
      %v671 = vcvt.s32.f32 %v639
      %v672 = vcvt.s32.f32 %v640
      %v673 = vcvt.s32.f32 %v641
      %v674 = vcvt.s32.f32 %v642
      %v675 = vcvt.s32.f32 %v643
      %v676 = vcvt.s32.f32 %v644
      %v677 = vcvt.s32.f32 %v645
      %v678 = vcvt.s32.f32 %v646
      %v679 = vcvt.s32.f32 %v647
      %v680 = vcvt.s32.f32 %v648
      %v681 = vcvt.s32.f32 %v649
      %vm682 = vcmask 97280
      %683 = vst.msk [vmem:[#allocation2] sm:$0xff] %vm682, 0.0
      %684 = vst.msk [vmem:[#allocation2 + $0x8] sm:$0xff] %vm682, 0.0
      %s685 = scalar_lea.vmem [#allocation2], 272
      %686 = vst.msk [vmem:[%s685] sm:$0xff] %vm682, 0.0
      %687 = vst.msk [vmem:[%s685 + $0x8] sm:$0xff] %vm682, 0.0
      %s688 = scalar_lea.vmem [#allocation2], 16
      %vm689 = vcmask 24576
      %690 = vst.msk [vmem:[%s688] sm:$0x1] %vm689, 0.0
      %691 = vst.msk [vmem:[%s688 + $0x10] sm:$0x1] %vm689, 0.0
      %692 = vst.msk [vmem:[%s688 + $0x20] sm:$0x1] %vm689, 0.0
      %693 = vst.msk [vmem:[%s688 + $0x30] sm:$0x1] %vm689, 0.0
      %694 = vst.msk [vmem:[%s688 + $0x40] sm:$0x1] %vm689, 0.0
      %695 = vst.msk [vmem:[%s688 + $0x50] sm:$0x1] %vm689, 0.0
      %696 = vst.msk [vmem:[%s688 + $0x60] sm:$0x1] %vm689, 0.0
      %697 = vst.msk [vmem:[%s688 + $0x70] sm:$0x1] %vm689, 0.0
      %698 = vst.msk [vmem:[%s688 + $0x80] sm:$0x1] %vm689, 0.0
      %699 = vst.msk [vmem:[%s688 + $0x90] sm:$0x1] %vm689, 0.0
      %700 = vst.msk [vmem:[%s688 + $0xa0] sm:$0x1] %vm689, 0.0
      %701 = vst.msk [vmem:[%s688 + $0xb0] sm:$0x1] %vm689, 0.0
      %702 = vst.msk [vmem:[%s688 + $0xc0] sm:$0x1] %vm689, 0.0
      %703 = vst.msk [vmem:[%s688 + $0xd0] sm:$0x1] %vm689, 0.0
      %704 = vst.msk [vmem:[%s688 + $0xe0] sm:$0x1] %vm689, 0.0
      %705 = vst.msk [vmem:[%s688 + $0xf0] sm:$0x1] %vm689, 0.0
      %vm706 = vcmask 90176
      %707 = vst.msk [vmem:[%s688 + $0xf] sm:$0x1] %vm706, 0.0
      %708 = vst.msk [vmem:[%s688 + $0x1f] sm:$0x1] %vm706, 0.0
      %709 = vst.msk [vmem:[%s688 + $0x2f] sm:$0x1] %vm706, 0.0
      %710 = vst.msk [vmem:[%s688 + $0x3f] sm:$0x1] %vm706, 0.0
      %711 = vst.msk [vmem:[%s688 + $0x4f] sm:$0x1] %vm706, 0.0
      %712 = vst.msk [vmem:[%s688 + $0x5f] sm:$0x1] %vm706, 0.0
      %713 = vst.msk [vmem:[%s688 + $0x6f] sm:$0x1] %vm706, 0.0
      %714 = vst.msk [vmem:[%s688 + $0x7f] sm:$0x1] %vm706, 0.0
      %715 = vst.msk [vmem:[%s688 + $0x8f] sm:$0x1] %vm706, 0.0
      %716 = vst.msk [vmem:[%s688 + $0x9f] sm:$0x1] %vm706, 0.0
      %717 = vst.msk [vmem:[%s688 + $0xaf] sm:$0x1] %vm706, 0.0
      %718 = vst.msk [vmem:[%s688 + $0xbf] sm:$0x1] %vm706, 0.0
      %719 = vst.msk [vmem:[%s688 + $0xcf] sm:$0x1] %vm706, 0.0
      %720 = vst.msk [vmem:[%s688 + $0xdf] sm:$0x1] %vm706, 0.0
      %721 = vst.msk [vmem:[%s688 + $0xef] sm:$0x1] %vm706, 0.0
      %722 = vst.msk [vmem:[%s688 + $0xff] sm:$0x1] %vm706, 0.0
      %vm723 = vcmask 31744
      %724 = vst.msk [vmem:[%s688 + $0x1] sm:$0xff] %vm723, %v650
      %vm725 = vcmask 30720
      %726 = vst.msk [vmem:[%s688 + $0x9] sm:$0x7f] %vm725, %v651
      %727 = vst.msk [vmem:[%s688 + $0x11] sm:$0xff] %vm723, %v652
      %728 = vst.msk [vmem:[%s688 + $0x19] sm:$0x7f] %vm725, %v653
      %729 = vst.msk [vmem:[%s688 + $0x21] sm:$0xff] %vm723, %v654
      %730 = vst.msk [vmem:[%s688 + $0x29] sm:$0x7f] %vm725, %v655
      %731 = vst.msk [vmem:[%s688 + $0x31] sm:$0xff] %vm723, %v656
      %732 = vst.msk [vmem:[%s688 + $0x39] sm:$0x7f] %vm725, %v657
      %733 = vst.msk [vmem:[%s688 + $0x41] sm:$0xff] %vm723, %v658
      %734 = vst.msk [vmem:[%s688 + $0x49] sm:$0x7f] %vm725, %v659
      %735 = vst.msk [vmem:[%s688 + $0x51] sm:$0xff] %vm723, %v660
      %736 = vst.msk [vmem:[%s688 + $0x59] sm:$0x7f] %vm725, %v661
      %737 = vst.msk [vmem:[%s688 + $0x61] sm:$0xff] %vm723, %v662
      %738 = vst.msk [vmem:[%s688 + $0x69] sm:$0x7f] %vm725, %v663
      %739 = vst.msk [vmem:[%s688 + $0x71] sm:$0xff] %vm723, %v664
      %740 = vst.msk [vmem:[%s688 + $0x79] sm:$0x7f] %vm725, %v665
      %741 = vst.msk [vmem:[%s688 + $0x81] sm:$0xff] %vm723, %v666
      %742 = vst.msk [vmem:[%s688 + $0x89] sm:$0x7f] %vm725, %v667
      %743 = vst.msk [vmem:[%s688 + $0x91] sm:$0xff] %vm723, %v668
      %744 = vst.msk [vmem:[%s688 + $0x99] sm:$0x7f] %vm725, %v669
      %745 = vst.msk [vmem:[%s688 + $0xa1] sm:$0xff] %vm723, %v670
      %746 = vst.msk [vmem:[%s688 + $0xa9] sm:$0x7f] %vm725, %v671
      %747 = vst.msk [vmem:[%s688 + $0xb1] sm:$0xff] %vm723, %v672
      %748 = vst.msk [vmem:[%s688 + $0xb9] sm:$0x7f] %vm725, %v673
      %749 = vst.msk [vmem:[%s688 + $0xc1] sm:$0xff] %vm723, %v674
      %750 = vst.msk [vmem:[%s688 + $0xc9] sm:$0x7f] %vm725, %v675
      %751 = vst.msk [vmem:[%s688 + $0xd1] sm:$0xff] %vm723, %v676
      %752 = vst.msk [vmem:[%s688 + $0xd9] sm:$0x7f] %vm725, %v677
      %753 = vst.msk [vmem:[%s688 + $0xe1] sm:$0xff] %vm723, %v678
      %754 = vst.msk [vmem:[%s688 + $0xe9] sm:$0x7f] %vm725, %v679
      %755 = vst.msk [vmem:[%s688 + $0xf1] sm:$0xff] %vm723, %v680
      %756 = vst.msk [vmem:[%s688 + $0xf9] sm:$0x7f] %vm725, %v681
      %789 = vrot.lane.b32.xlu0 %v650, 4
      %v790 = vpop.permute.xlu0 %789
      %791 = vrot.lane.b32.xlu0 %v651, 4
      %v792 = vpop.permute.xlu0 %791
      %793 = vrot.lane.b32.xlu0 %v652, 4
      %v794 = vpop.permute.xlu0 %793
      %795 = vrot.lane.b32.xlu0 %v653, 4
      %v796 = vpop.permute.xlu0 %795
      %797 = vrot.lane.b32.xlu0 %v654, 4
      %v798 = vpop.permute.xlu0 %797
      %799 = vrot.lane.b32.xlu0 %v655, 4
      %v800 = vpop.permute.xlu0 %799
      %801 = vrot.lane.b32.xlu0 %v656, 4
      %v802 = vpop.permute.xlu0 %801
      %803 = vrot.lane.b32.xlu0 %v657, 4
      %v804 = vpop.permute.xlu0 %803
      %805 = vrot.lane.b32.xlu0 %v658, 4
      %v806 = vpop.permute.xlu0 %805
      %807 = vrot.lane.b32.xlu0 %v659, 4
      %v808 = vpop.permute.xlu0 %807
      %809 = vrot.lane.b32.xlu0 %v660, 4
      %v810 = vpop.permute.xlu0 %809
      %811 = vrot.lane.b32.xlu0 %v661, 4
      %v812 = vpop.permute.xlu0 %811
      %813 = vrot.lane.b32.xlu0 %v662, 4
      %v814 = vpop.permute.xlu0 %813
      %815 = vrot.lane.b32.xlu0 %v663, 4
      %v816 = vpop.permute.xlu0 %815
      %817 = vrot.lane.b32.xlu0 %v664, 4
      %v818 = vpop.permute.xlu0 %817
      %819 = vrot.lane.b32.xlu0 %v665, 4
      %v820 = vpop.permute.xlu0 %819
      %821 = vrot.lane.b32.xlu0 %v666, 4
      %v822 = vpop.permute.xlu0 %821
      %823 = vrot.lane.b32.xlu0 %v667, 4
      %v824 = vpop.permute.xlu0 %823
      %825 = vrot.lane.b32.xlu0 %v668, 4
      %v826 = vpop.permute.xlu0 %825
      %827 = vrot.lane.b32.xlu0 %v669, 4
      %v828 = vpop.permute.xlu0 %827
      %829 = vrot.lane.b32.xlu0 %v670, 4
      %v830 = vpop.permute.xlu0 %829
      %831 = vrot.lane.b32.xlu0 %v671, 4
      %v832 = vpop.permute.xlu0 %831
      %833 = vrot.lane.b32.xlu0 %v672, 4
      %v834 = vpop.permute.xlu0 %833
      %835 = vrot.lane.b32.xlu0 %v673, 4
      %v836 = vpop.permute.xlu0 %835
      %837 = vrot.lane.b32.xlu0 %v674, 4
      %v838 = vpop.permute.xlu0 %837
      %839 = vrot.lane.b32.xlu0 %v675, 4
      %v840 = vpop.permute.xlu0 %839
      %841 = vrot.lane.b32.xlu0 %v676, 4
      %v842 = vpop.permute.xlu0 %841
      %843 = vrot.lane.b32.xlu0 %v677, 4
      %v844 = vpop.permute.xlu0 %843
      %845 = vrot.lane.b32.xlu0 %v678, 4
      %v846 = vpop.permute.xlu0 %845
      %847 = vrot.lane.b32.xlu0 %v679, 4
      %v848 = vpop.permute.xlu0 %847
      %849 = vrot.lane.b32.xlu0 %v680, 4
      %v850 = vpop.permute.xlu0 %849
      %851 = vrot.lane.b32.xlu0 %v681, 4
      %v852 = vpop.permute.xlu0 %851
      %vm885 = vcmask 64544
      %886 = vst.msk [vmem:[%s688] sm:$0xff] %vm885, %v790
      %887 = vst.msk [vmem:[%s688 + $0x8] sm:$0xff] %vm885, %v792
      %888 = vst.msk [vmem:[%s688 + $0x10] sm:$0xff] %vm885, %v794
      %889 = vst.msk [vmem:[%s688 + $0x18] sm:$0xff] %vm885, %v796
      %890 = vst.msk [vmem:[%s688 + $0x20] sm:$0xff] %vm885, %v798
      %891 = vst.msk [vmem:[%s688 + $0x28] sm:$0xff] %vm885, %v800
      %892 = vst.msk [vmem:[%s688 + $0x30] sm:$0xff] %vm885, %v802
      %893 = vst.msk [vmem:[%s688 + $0x38] sm:$0xff] %vm885, %v804
      %894 = vst.msk [vmem:[%s688 + $0x40] sm:$0xff] %vm885, %v806
      %895 = vst.msk [vmem:[%s688 + $0x48] sm:$0xff] %vm885, %v808
      %896 = vst.msk [vmem:[%s688 + $0x50] sm:$0xff] %vm885, %v810
      %897 = vst.msk [vmem:[%s688 + $0x58] sm:$0xff] %vm885, %v812
      %898 = vst.msk [vmem:[%s688 + $0x60] sm:$0xff] %vm885, %v814
      %899 = vst.msk [vmem:[%s688 + $0x68] sm:$0xff] %vm885, %v816
      %900 = vst.msk [vmem:[%s688 + $0x70] sm:$0xff] %vm885, %v818
      %901 = vst.msk [vmem:[%s688 + $0x78] sm:$0xff] %vm885, %v820
      %902 = vst.msk [vmem:[%s688 + $0x80] sm:$0xff] %vm885, %v822
      %903 = vst.msk [vmem:[%s688 + $0x88] sm:$0xff] %vm885, %v824
      %904 = vst.msk [vmem:[%s688 + $0x90] sm:$0xff] %vm885, %v826
      %905 = vst.msk [vmem:[%s688 + $0x98] sm:$0xff] %vm885, %v828
      %906 = vst.msk [vmem:[%s688 + $0xa0] sm:$0xff] %vm885, %v830
      %907 = vst.msk [vmem:[%s688 + $0xa8] sm:$0xff] %vm885, %v832
      %908 = vst.msk [vmem:[%s688 + $0xb0] sm:$0xff] %vm885, %v834
      %909 = vst.msk [vmem:[%s688 + $0xb8] sm:$0xff] %vm885, %v836
      %910 = vst.msk [vmem:[%s688 + $0xc0] sm:$0xff] %vm885, %v838
      %911 = vst.msk [vmem:[%s688 + $0xc8] sm:$0xff] %vm885, %v840
      %912 = vst.msk [vmem:[%s688 + $0xd0] sm:$0xff] %vm885, %v842
      %913 = vst.msk [vmem:[%s688 + $0xd8] sm:$0xff] %vm885, %v844
      %914 = vst.msk [vmem:[%s688 + $0xe0] sm:$0xff] %vm885, %v846
      %915 = vst.msk [vmem:[%s688 + $0xe8] sm:$0xff] %vm885, %v848
      %916 = vst.msk [vmem:[%s688 + $0xf0] sm:$0xff] %vm885, %v850
      %917 = vst.msk [vmem:[%s688 + $0xf8] sm:$0xff] %vm885, %v852
      %918 = vrot.lane.b32.xlu0 %v650, 8
      %v919 = vpop.permute.xlu0 %918
      %920 = vrot.lane.b32.xlu0 %v651, 8
      %v921 = vpop.permute.xlu0 %920
      %922 = vrot.lane.b32.xlu0 %v652, 8
      %v923 = vpop.permute.xlu0 %922
      %924 = vrot.lane.b32.xlu0 %v653, 8
      %v925 = vpop.permute.xlu0 %924
      %926 = vrot.lane.b32.xlu0 %v654, 8
      %v927 = vpop.permute.xlu0 %926
      %928 = vrot.lane.b32.xlu0 %v655, 8
      %v929 = vpop.permute.xlu0 %928
      %930 = vrot.lane.b32.xlu0 %v656, 8
      %v931 = vpop.permute.xlu0 %930
      %932 = vrot.lane.b32.xlu0 %v657, 8
      %v933 = vpop.permute.xlu0 %932
      %934 = vrot.lane.b32.xlu0 %v658, 8
      %v935 = vpop.permute.xlu0 %934
      %936 = vrot.lane.b32.xlu0 %v659, 8
      %v937 = vpop.permute.xlu0 %936
      %938 = vrot.lane.b32.xlu0 %v660, 8
      %v939 = vpop.permute.xlu0 %938
      %940 = vrot.lane.b32.xlu0 %v661, 8
      %v941 = vpop.permute.xlu0 %940
      %942 = vrot.lane.b32.xlu0 %v662, 8
      %v943 = vpop.permute.xlu0 %942
      %944 = vrot.lane.b32.xlu0 %v663, 8
      %v945 = vpop.permute.xlu0 %944
      %946 = vrot.lane.b32.xlu0 %v664, 8
      %v947 = vpop.permute.xlu0 %946
      %948 = vrot.lane.b32.xlu0 %v665, 8
      %v949 = vpop.permute.xlu0 %948
      %950 = vrot.lane.b32.xlu0 %v666, 8
      %v951 = vpop.permute.xlu0 %950
      %952 = vrot.lane.b32.xlu0 %v667, 8
      %v953 = vpop.permute.xlu0 %952
      %954 = vrot.lane.b32.xlu0 %v668, 8
      %v955 = vpop.permute.xlu0 %954
      %956 = vrot.lane.b32.xlu0 %v669, 8
      %v957 = vpop.permute.xlu0 %956
      %958 = vrot.lane.b32.xlu0 %v670, 8
      %v959 = vpop.permute.xlu0 %958
      %960 = vrot.lane.b32.xlu0 %v671, 8
      %v961 = vpop.permute.xlu0 %960
      %962 = vrot.lane.b32.xlu0 %v672, 8
      %v963 = vpop.permute.xlu0 %962
      %964 = vrot.lane.b32.xlu0 %v673, 8
      %v965 = vpop.permute.xlu0 %964
      %966 = vrot.lane.b32.xlu0 %v674, 8
      %v967 = vpop.permute.xlu0 %966
      %968 = vrot.lane.b32.xlu0 %v675, 8
      %v969 = vpop.permute.xlu0 %968
      %970 = vrot.lane.b32.xlu0 %v676, 8
      %v971 = vpop.permute.xlu0 %970
      %972 = vrot.lane.b32.xlu0 %v677, 8
      %v973 = vpop.permute.xlu0 %972
      %974 = vrot.lane.b32.xlu0 %v678, 8
      %v975 = vpop.permute.xlu0 %974
      %976 = vrot.lane.b32.xlu0 %v679, 8
      %v977 = vpop.permute.xlu0 %976
      %978 = vrot.lane.b32.xlu0 %v680, 8
      %v979 = vpop.permute.xlu0 %978
      %980 = vrot.lane.b32.xlu0 %v681, 8
      %v981 = vpop.permute.xlu0 %980
      %vm1014 = vcmask 97345
      %1015 = vst.msk [vmem:[%s688 - $0x1] sm:$0xfe] %vm1014, %v919
      %vm1016 = vcmask 97344
      %1017 = vst.msk [vmem:[%s688 + $0x7] sm:$0xff] %vm1016, %v921
      %1018 = vst.msk [vmem:[%s688 + $0xf] sm:$0xfe] %vm1014, %v923
      %1019 = vst.msk [vmem:[%s688 + $0x17] sm:$0xff] %vm1016, %v925
      %1020 = vst.msk [vmem:[%s688 + $0x1f] sm:$0xfe] %vm1014, %v927
      %1021 = vst.msk [vmem:[%s688 + $0x27] sm:$0xff] %vm1016, %v929
      %1022 = vst.msk [vmem:[%s688 + $0x2f] sm:$0xfe] %vm1014, %v931
      %1023 = vst.msk [vmem:[%s688 + $0x37] sm:$0xff] %vm1016, %v933
      %1024 = vst.msk [vmem:[%s688 + $0x3f] sm:$0xfe] %vm1014, %v935
      %1025 = vst.msk [vmem:[%s688 + $0x47] sm:$0xff] %vm1016, %v937
      %1026 = vst.msk [vmem:[%s688 + $0x4f] sm:$0xfe] %vm1014, %v939
      %1027 = vst.msk [vmem:[%s688 + $0x57] sm:$0xff] %vm1016, %v941
      %1028 = vst.msk [vmem:[%s688 + $0x5f] sm:$0xfe] %vm1014, %v943
      %1029 = vst.msk [vmem:[%s688 + $0x67] sm:$0xff] %vm1016, %v945
      %1030 = vst.msk [vmem:[%s688 + $0x6f] sm:$0xfe] %vm1014, %v947
      %1031 = vst.msk [vmem:[%s688 + $0x77] sm:$0xff] %vm1016, %v949
      %1032 = vst.msk [vmem:[%s688 + $0x7f] sm:$0xfe] %vm1014, %v951
      %1033 = vst.msk [vmem:[%s688 + $0x87] sm:$0xff] %vm1016, %v953
      %1034 = vst.msk [vmem:[%s688 + $0x8f] sm:$0xfe] %vm1014, %v955
      %1035 = vst.msk [vmem:[%s688 + $0x97] sm:$0xff] %vm1016, %v957
      %1036 = vst.msk [vmem:[%s688 + $0x9f] sm:$0xfe] %vm1014, %v959
      %1037 = vst.msk [vmem:[%s688 + $0xa7] sm:$0xff] %vm1016, %v961
      %1038 = vst.msk [vmem:[%s688 + $0xaf] sm:$0xfe] %vm1014, %v963
      %1039 = vst.msk [vmem:[%s688 + $0xb7] sm:$0xff] %vm1016, %v965
      %1040 = vst.msk [vmem:[%s688 + $0xbf] sm:$0xfe] %vm1014, %v967
      %1041 = vst.msk [vmem:[%s688 + $0xc7] sm:$0xff] %vm1016, %v969
      %1042 = vst.msk [vmem:[%s688 + $0xcf] sm:$0xfe] %vm1014, %v971
      %1043 = vst.msk [vmem:[%s688 + $0xd7] sm:$0xff] %vm1016, %v973
      %1044 = vst.msk [vmem:[%s688 + $0xdf] sm:$0xfe] %vm1014, %v975
      %1045 = vst.msk [vmem:[%s688 + $0xe7] sm:$0xff] %vm1016, %v977
      %1046 = vst.msk [vmem:[%s688 + $0xef] sm:$0xfe] %vm1014, %v979
      %1047 = vst.msk [vmem:[%s688 + $0xf7] sm:$0xff] %vm1016, %v981
      %v1048 = vld [vmem:[#allocation2] sm:$0xff]
      %v1049 = vld [vmem:[#allocation2 + $0x8] sm:$0xff]
      %v1050 = vld [vmem:[#allocation2 + $0x10] sm:$0xff]
      %v1051 = vld [vmem:[#allocation2 + $0x18] sm:$0xff]
      %v1052 = vld [vmem:[#allocation2 + $0x20] sm:$0xff]
      %v1053 = vld [vmem:[#allocation2 + $0x28] sm:$0xff]
      %v1054 = vld [vmem:[#allocation2 + $0x30] sm:$0xff]
      %v1055 = vld [vmem:[#allocation2 + $0x38] sm:$0xff]
      %v1056 = vld [vmem:[#allocation2 + $0x40] sm:$0xff]
      %v1057 = vld [vmem:[#allocation2 + $0x48] sm:$0xff]
      %v1058 = vld [vmem:[#allocation2 + $0x50] sm:$0xff]
      %v1059 = vld [vmem:[#allocation2 + $0x58] sm:$0xff]
      %v1060 = vld [vmem:[#allocation2 + $0x60] sm:$0xff]
      %v1061 = vld [vmem:[#allocation2 + $0x68] sm:$0xff]
      %v1062 = vld [vmem:[#allocation2 + $0x70] sm:$0xff]
      %v1063 = vld [vmem:[#allocation2 + $0x78] sm:$0xff]
      %v1064 = vld [vmem:[#allocation2 + $0x80] sm:$0xff]
      %v1065 = vld [vmem:[#allocation2 + $0x88] sm:$0xff]
      %v1066 = vld [vmem:[#allocation2 + $0x90] sm:$0xff]
      %v1067 = vld [vmem:[#allocation2 + $0x98] sm:$0xff]
      %v1068 = vld [vmem:[#allocation2 + $0xa0] sm:$0xff]
      %v1069 = vld [vmem:[#allocation2 + $0xa8] sm:$0xff]
      %v1070 = vld [vmem:[#allocation2 + $0xb0] sm:$0xff]
      %v1071 = vld [vmem:[#allocation2 + $0xb8] sm:$0xff]
      %v1072 = vld [vmem:[#allocation2 + $0xc0] sm:$0xff]
      %v1073 = vld [vmem:[#allocation2 + $0xc8] sm:$0xff]
      %v1074 = vld [vmem:[#allocation2 + $0xd0] sm:$0xff]
      %v1075 = vld [vmem:[#allocation2 + $0xd8] sm:$0xff]
      %v1076 = vld [vmem:[#allocation2 + $0xe0] sm:$0xff]
      %v1077 = vld [vmem:[#allocation2 + $0xe8] sm:$0xff]
      %v1078 = vld [vmem:[#allocation2 + $0xf0] sm:$0xff]
      %v1079 = vld [vmem:[#allocation2 + $0xf8] sm:$0xff]
      %v1080 = vld [vmem:[%s2] sm:$0xff]
      %v1081 = vld [vmem:[%s2 + $0x8] sm:$0xf]
      %v1082 = vld [vmem:[%s688] sm:$0xff]
      %v1083 = vld [vmem:[%s688 + $0x8] sm:$0xff]
      %v1084 = vld [vmem:[%s688 + $0x10] sm:$0xff]
      %v1085 = vld [vmem:[%s688 + $0x18] sm:$0xff]
      %v1086 = vld [vmem:[%s688 + $0x20] sm:$0xff]
      %v1087 = vld [vmem:[%s688 + $0x28] sm:$0xff]
      %v1088 = vld [vmem:[%s688 + $0x30] sm:$0xff]
      %v1089 = vld [vmem:[%s688 + $0x38] sm:$0xff]
      %v1090 = vld [vmem:[%s688 + $0x40] sm:$0xff]
      %v1091 = vld [vmem:[%s688 + $0x48] sm:$0xff]
      %v1092 = vld [vmem:[%s688 + $0x50] sm:$0xff]
      %v1093 = vld [vmem:[%s688 + $0x58] sm:$0xff]
      %v1094 = vld [vmem:[%s688 + $0x60] sm:$0xff]
      %v1095 = vld [vmem:[%s688 + $0x68] sm:$0xff]
      %v1096 = vld [vmem:[%s688 + $0x70] sm:$0xff]
      %v1097 = vld [vmem:[%s688 + $0x78] sm:$0xff]
      %v1098 = vld [vmem:[%s688 + $0x80] sm:$0xff]
      %v1099 = vld [vmem:[%s688 + $0x88] sm:$0xff]
      %v1100 = vld [vmem:[%s688 + $0x90] sm:$0xff]
      %v1101 = vld [vmem:[%s688 + $0x98] sm:$0xff]
      %v1102 = vld [vmem:[%s688 + $0xa0] sm:$0xff]
      %v1103 = vld [vmem:[%s688 + $0xa8] sm:$0xff]
      %v1104 = vld [vmem:[%s688 + $0xb0] sm:$0xff]
      %v1105 = vld [vmem:[%s688 + $0xb8] sm:$0xff]
      %v1106 = vld [vmem:[%s688 + $0xc0] sm:$0xff]
      %v1107 = vld [vmem:[%s688 + $0xc8] sm:$0xff]
      %v1108 = vld [vmem:[%s688 + $0xd0] sm:$0xff]
      %v1109 = vld [vmem:[%s688 + $0xd8] sm:$0xff]
      %v1110 = vld [vmem:[%s688 + $0xe0] sm:$0xff]
      %v1111 = vld [vmem:[%s688 + $0xe8] sm:$0xff]
      %v1112 = vld [vmem:[%s688 + $0xf0] sm:$0xff]
      %v1113 = vld [vmem:[%s688 + $0xf8] sm:$0xff]
      %s1114 = scalar_lea.vmem %s2, 16
      %v1115 = vld [vmem:[%s1114] sm:$0xff]
      %v1116 = vld [vmem:[%s1114 + $0x8] sm:$0xf]
      %v1118 = vsel %vm682, %v1082, 0
      %v1121 = vsel %vm682, %v1083, 0
      %v1124 = vsel %vm682, %v1084, 0
      %v1127 = vsel %vm682, %v1085, 0
      %v1130 = vsel %vm682, %v1086, 0
      %v1133 = vsel %vm682, %v1087, 0
      %v1136 = vsel %vm682, %v1088, 0
      %v1139 = vsel %vm682, %v1089, 0
      %v1142 = vsel %vm682, %v1090, 0
      %v1145 = vsel %vm682, %v1091, 0
      %v1148 = vsel %vm682, %v1092, 0
      %v1151 = vsel %vm682, %v1093, 0
      %v1154 = vsel %vm682, %v1094, 0
      %v1157 = vsel %vm682, %v1095, 0
      %v1160 = vsel %vm682, %v1096, 0
      %v1163 = vsel %vm682, %v1097, 0
      %v1166 = vsel %vm682, %v1098, 0
      %v1169 = vsel %vm682, %v1099, 0
      %v1172 = vsel %vm682, %v1100, 0
      %v1175 = vsel %vm682, %v1101, 0
      %v1178 = vsel %vm682, %v1102, 0
      %v1181 = vsel %vm682, %v1103, 0
      %v1184 = vsel %vm682, %v1104, 0
      %v1187 = vsel %vm682, %v1105, 0
      %v1190 = vsel %vm682, %v1106, 0
      %v1193 = vsel %vm682, %v1107, 0
      %v1196 = vsel %vm682, %v1108, 0
      %v1199 = vsel %vm682, %v1109, 0
      %v1202 = vsel %vm682, %v1110, 0
      %v1205 = vsel %vm682, %v1111, 0
      %v1208 = vsel %vm682, %v1112, 0
      %v1211 = vsel %vm682, %v1113, 0
      %vm1213 = vcmask 1043456
      %v1215 = vsel %vm1213, %v1116, 0
      %1217 = vmatprep.subr.mxu0 0.0
      %1218 = vmatpush1.msra.mxu0 %v1115
      %1219 = vmatprep.subr.mxu0 0.0
      %1220 = vmatpush1.msra.mxu0 %v1215
      %1221 = vmatprep.subr.mxu0 0.0
      %1222 = vmatpush1.msra.mxu0 0.0
      %1223 = vmatprep.subr.mxu0 0.0
      %1224 = vmatpush1.msra.mxu0 0.0
      %1225 = vmatprep.subr.mxu0 0.0
      %1226 = vmatpush1.msra.mxu0 0.0
      %1227 = vmatprep.subr.mxu0 0.0
      %1228 = vmatpush1.msra.mxu0 0.0
      %1229 = vmatprep.subr.mxu0 0.0
      %1230 = vmatpush1.msra.mxu0 0.0
      %1231 = vmatprep.subr.mxu0 0.0
      %1232 = vmatpush1.msra.mxu0 0.0
      %1233 = vmatprep.subr.mxu0 0.0
      %1234 = vmatpush1.msra.mxu0 0.0
      %1235 = vmatprep.subr.mxu0 0.0
      %1236 = vmatpush1.msra.mxu0 0.0
      %1237 = vmatprep.subr.mxu0 0.0
      %1238 = vmatpush1.msra.mxu0 0.0
      %1239 = vmatprep.subr.mxu0 0.0
      %1240 = vmatpush1.msra.mxu0 0.0
      %1241 = vmatprep.subr.mxu0 0.0
      %1242 = vmatpush1.msra.mxu0 0.0
      %1243 = vmatprep.subr.mxu0 0.0
      %1244 = vmatpush1.msra.mxu0 0.0
      %1245 = vmatprep.subr.mxu0 0.0
      %1246 = vmatpush1.msra.mxu0 0.0
      %1247 = vmatprep.subr.mxu0 0.0
      %1248 = vmatpush1.msra.mxu0 0.0
      %1249 = vmatprep.subr.mxu0 0.0
      %1250 = vmatpush1.msra.mxu0 0.0
      %1251 = vmatprep.subr.mxu0 0.0
      %1252 = vmatpush1.msra.mxu0 0.0
      %1253 = vmatprep.subr.mxu0 0.0
      %1254 = vmatpush1.msra.mxu0 0.0
      %1255 = vmatprep.subr.mxu0 0.0
      %1256 = vmatpush1.msra.mxu0 0.0
      %1257 = vmatprep.subr.mxu0 0.0
      %1258 = vmatpush1.msra.mxu0 0.0
      %1259 = vmatprep.subr.mxu0 0.0
      %1260 = vmatpush1.msra.mxu0 0.0
      %1261 = vmatprep.subr.mxu0 0.0
      %1262 = vmatpush1.msra.mxu0 0.0
      %1263 = vmatprep.subr.mxu0 0.0
      %1264 = vmatpush1.msra.mxu0 0.0
      %1265 = vmatprep.subr.mxu0 0.0
      %1266 = vmatpush1.msra.mxu0 0.0
      %1267 = vmatprep.subr.mxu0 0.0
      %1268 = vmatpush1.msra.mxu0 0.0
      %1269 = vmatprep.subr.mxu0 0.0
      %1270 = vmatpush1.msra.mxu0 0.0
      %1271 = vmatprep.subr.mxu0 0.0
      %1272 = vmatpush1.msra.mxu0 0.0
      %1273 = vmatprep.subr.mxu0 0.0
      %1274 = vmatpush1.msra.mxu0 0.0
      %1275 = vmatprep.subr.mxu0 0.0
      %1276 = vmatpush1.msra.mxu0 0.0
      %1277 = vmatprep.subr.mxu0 0.0
      %1278 = vmatpush1.msra.mxu0 0.0
      %1279 = vmatprep.subr.mxu0 0.0
      %1280 = vmatpush1.msra.mxu0 0.0
      %1281 = vmatprep.mubr.f32.mxu0 0.0
      %1282 = vmatmul.mubr.f32.gmra.mrb[0].mxu0 %v1118
      %v1283 = vpop.f32.mrb[0].mxu0
      %v1284 = vadd.f32 0.0, %v1283
      %v1285 = vpop.f32.mrb[0].mxu0
      %1286 = vmatprep.mubr.f32.mxu0 0.0
      %1287 = vmatmul.mubr.f32.gmra.mrb[0].mxu0 %v1121
      %v1288 = vpop.f32.mrb[0].mxu0
      %v1289 = vadd.f32 0.0, %v1288
      %v1290 = vpop.f32.mrb[0].mxu0
      %1291 = vmatprep.mubr.f32.mxu0 0.0
      %1292 = vmatmul.mubr.f32.gmra.mrb[0].mxu0 %v1124
      %v1293 = vpop.f32.mrb[0].mxu0
      %v1294 = vadd.f32 0.0, %v1293
      %v1295 = vpop.f32.mrb[0].mxu0
      %1296 = vmatprep.mubr.f32.mxu0 0.0
      %1297 = vmatmul.mubr.f32.gmra.mrb[0].mxu0 %v1127
      %v1298 = vpop.f32.mrb[0].mxu0
      %v1299 = vadd.f32 0.0, %v1298
      %v1300 = vpop.f32.mrb[0].mxu0
      %1301 = vmatprep.mubr.f32.mxu0 0.0
      %1302 = vmatmul.mubr.f32.gmra.mrb[0].mxu0 %v1130
      %v1303 = vpop.f32.mrb[0].mxu0
      %v1304 = vadd.f32 0.0, %v1303
      %v1305 = vpop.f32.mrb[0].mxu0
      %1306 = vmatprep.mubr.f32.mxu0 0.0
      %1307 = vmatmul.mubr.f32.gmra.mrb[0].mxu0 %v1133
      %v1308 = vpop.f32.mrb[0].mxu0
      %v1309 = vadd.f32 0.0, %v1308
      %v1310 = vpop.f32.mrb[0].mxu0
      %1311 = vmatprep.mubr.f32.mxu0 0.0
      %1312 = vmatmul.mubr.f32.gmra.mrb[0].mxu0 %v1136
      %v1313 = vpop.f32.mrb[0].mxu0
      %v1314 = vadd.f32 0.0, %v1313
      %v1315 = vpop.f32.mrb[0].mxu0
      %1316 = vmatprep.mubr.f32.mxu0 0.0
      %1317 = vmatmul.mubr.f32.gmra.mrb[0].mxu0 %v1139
      %v1318 = vpop.f32.mrb[0].mxu0
      %v1319 = vadd.f32 0.0, %v1318
      %v1320 = vpop.f32.mrb[0].mxu0
      %1321 = vmatprep.mubr.f32.mxu0 0.0
      %1322 = vmatmul.mubr.f32.gmra.mrb[0].mxu0 %v1142
      %v1323 = vpop.f32.mrb[0].mxu0
      %v1324 = vadd.f32 0.0, %v1323
      %v1325 = vpop.f32.mrb[0].mxu0
      %1326 = vmatprep.mubr.f32.mxu0 0.0
      %1327 = vmatmul.mubr.f32.gmra.mrb[0].mxu0 %v1145
      %v1328 = vpop.f32.mrb[0].mxu0
      %v1329 = vadd.f32 0.0, %v1328
      %v1330 = vpop.f32.mrb[0].mxu0
      %1331 = vmatprep.mubr.f32.mxu0 0.0
      %1332 = vmatmul.mubr.f32.gmra.mrb[0].mxu0 %v1148
      %v1333 = vpop.f32.mrb[0].mxu0
      %v1334 = vadd.f32 0.0, %v1333
      %v1335 = vpop.f32.mrb[0].mxu0
      %1336 = vmatprep.mubr.f32.mxu0 0.0
      %1337 = vmatmul.mubr.f32.gmra.mrb[0].mxu0 %v1151
      %v1338 = vpop.f32.mrb[0].mxu0
      %v1339 = vadd.f32 0.0, %v1338
      %v1340 = vpop.f32.mrb[0].mxu0
      %1341 = vmatprep.mubr.f32.mxu0 0.0
      %1342 = vmatmul.mubr.f32.gmra.mrb[0].mxu0 %v1154
      %v1343 = vpop.f32.mrb[0].mxu0
      %v1344 = vadd.f32 0.0, %v1343
      %v1345 = vpop.f32.mrb[0].mxu0
      %1346 = vmatprep.mubr.f32.mxu0 0.0
      %1347 = vmatmul.mubr.f32.gmra.mrb[0].mxu0 %v1157
      %v1348 = vpop.f32.mrb[0].mxu0
      %v1349 = vadd.f32 0.0, %v1348
      %v1350 = vpop.f32.mrb[0].mxu0
      %1351 = vmatprep.mubr.f32.mxu0 0.0
      %1352 = vmatmul.mubr.f32.gmra.mrb[0].mxu0 %v1160
      %v1353 = vpop.f32.mrb[0].mxu0
      %v1354 = vadd.f32 0.0, %v1353
      %v1355 = vpop.f32.mrb[0].mxu0
      %1356 = vmatprep.mubr.f32.mxu0 0.0
      %1357 = vmatmul.mubr.f32.gmra.mrb[0].mxu0 %v1163
      %v1358 = vpop.f32.mrb[0].mxu0
      %v1359 = vadd.f32 0.0, %v1358
      %v1360 = vpop.f32.mrb[0].mxu0
      %1361 = vmatprep.mubr.f32.mxu0 0.0
      %1362 = vmatmul.mubr.f32.gmra.mrb[0].mxu0 %v1166
      %v1363 = vpop.f32.mrb[0].mxu0
      %v1364 = vadd.f32 0.0, %v1363
      %v1365 = vpop.f32.mrb[0].mxu0
      %1366 = vmatprep.mubr.f32.mxu0 0.0
      %1367 = vmatmul.mubr.f32.gmra.mrb[0].mxu0 %v1169
      %v1368 = vpop.f32.mrb[0].mxu0
      %v1369 = vadd.f32 0.0, %v1368
      %v1370 = vpop.f32.mrb[0].mxu0
      %1371 = vmatprep.mubr.f32.mxu0 0.0
      %1372 = vmatmul.mubr.f32.gmra.mrb[0].mxu0 %v1172
      %v1373 = vpop.f32.mrb[0].mxu0
      %v1374 = vadd.f32 0.0, %v1373
      %v1375 = vpop.f32.mrb[0].mxu0
      %1376 = vmatprep.mubr.f32.mxu0 0.0
      %1377 = vmatmul.mubr.f32.gmra.mrb[0].mxu0 %v1175
      %v1378 = vpop.f32.mrb[0].mxu0
      %v1379 = vadd.f32 0.0, %v1378
      %v1380 = vpop.f32.mrb[0].mxu0
      %1381 = vmatprep.mubr.f32.mxu0 0.0
      %1382 = vmatmul.mubr.f32.gmra.mrb[0].mxu0 %v1178
      %v1383 = vpop.f32.mrb[0].mxu0
      %v1384 = vadd.f32 0.0, %v1383
      %v1385 = vpop.f32.mrb[0].mxu0
      %1386 = vmatprep.mubr.f32.mxu0 0.0
      %1387 = vmatmul.mubr.f32.gmra.mrb[0].mxu0 %v1181
      %v1388 = vpop.f32.mrb[0].mxu0
      %v1389 = vadd.f32 0.0, %v1388
      %v1390 = vpop.f32.mrb[0].mxu0
      %1391 = vmatprep.mubr.f32.mxu0 0.0
      %1392 = vmatmul.mubr.f32.gmra.mrb[0].mxu0 %v1184
      %v1393 = vpop.f32.mrb[0].mxu0
      %v1394 = vadd.f32 0.0, %v1393
      %v1395 = vpop.f32.mrb[0].mxu0
      %1396 = vmatprep.mubr.f32.mxu0 0.0
      %1397 = vmatmul.mubr.f32.gmra.mrb[0].mxu0 %v1187
      %v1398 = vpop.f32.mrb[0].mxu0
      %v1399 = vadd.f32 0.0, %v1398
      %v1400 = vpop.f32.mrb[0].mxu0
      %1401 = vmatprep.mubr.f32.mxu0 0.0
      %1402 = vmatmul.mubr.f32.gmra.mrb[0].mxu0 %v1190
      %v1403 = vpop.f32.mrb[0].mxu0
      %v1404 = vadd.f32 0.0, %v1403
      %v1405 = vpop.f32.mrb[0].mxu0
      %1406 = vmatprep.mubr.f32.mxu0 0.0
      %1407 = vmatmul.mubr.f32.gmra.mrb[0].mxu0 %v1193
      %v1408 = vpop.f32.mrb[0].mxu0
      %v1409 = vadd.f32 0.0, %v1408
      %v1410 = vpop.f32.mrb[0].mxu0
      %1411 = vmatprep.mubr.f32.mxu0 0.0
      %1412 = vmatmul.mubr.f32.gmra.mrb[0].mxu0 %v1196
      %v1413 = vpop.f32.mrb[0].mxu0
      %v1414 = vadd.f32 0.0, %v1413
      %v1415 = vpop.f32.mrb[0].mxu0
      %1416 = vmatprep.mubr.f32.mxu0 0.0
      %1417 = vmatmul.mubr.f32.gmra.mrb[0].mxu0 %v1199
      %v1418 = vpop.f32.mrb[0].mxu0
      %v1419 = vadd.f32 0.0, %v1418
      %v1420 = vpop.f32.mrb[0].mxu0
      %1421 = vmatprep.mubr.f32.mxu0 0.0
      %1422 = vmatmul.mubr.f32.gmra.mrb[0].mxu0 %v1202
      %v1423 = vpop.f32.mrb[0].mxu0
      %v1424 = vadd.f32 0.0, %v1423
      %v1425 = vpop.f32.mrb[0].mxu0
      %1426 = vmatprep.mubr.f32.mxu0 0.0
      %1427 = vmatmul.mubr.f32.gmra.mrb[0].mxu0 %v1205
      %v1428 = vpop.f32.mrb[0].mxu0
      %v1429 = vadd.f32 0.0, %v1428
      %v1430 = vpop.f32.mrb[0].mxu0
      %1431 = vmatprep.mubr.f32.mxu0 0.0
      %1432 = vmatmul.mubr.f32.gmra.mrb[0].mxu0 %v1208
      %v1433 = vpop.f32.mrb[0].mxu0
      %v1434 = vadd.f32 0.0, %v1433
      %v1435 = vpop.f32.mrb[0].mxu0
      %1436 = vmatprep.mubr.f32.mxu0 0.0
      %1437 = vmatmul.mubr.f32.gmra.mrb[0].mxu0 %v1211
      %v1438 = vpop.f32.mrb[0].mxu0
      %v1439 = vadd.f32 0.0, %v1438
      %v1440 = vpop.f32.mrb[0].mxu0
      %1441 = vdwg.mxu0
      %v1443 = vsel %vm682, %v1048, 0
      %v1446 = vsel %vm682, %v1049, 0
      %v1449 = vsel %vm682, %v1050, 0
      %v1452 = vsel %vm682, %v1051, 0
      %v1455 = vsel %vm682, %v1052, 0
      %v1458 = vsel %vm682, %v1053, 0
      %v1461 = vsel %vm682, %v1054, 0
      %v1464 = vsel %vm682, %v1055, 0
      %v1467 = vsel %vm682, %v1056, 0
      %v1470 = vsel %vm682, %v1057, 0
      %v1473 = vsel %vm682, %v1058, 0
      %v1476 = vsel %vm682, %v1059, 0
      %v1479 = vsel %vm682, %v1060, 0
      %v1482 = vsel %vm682, %v1061, 0
      %v1485 = vsel %vm682, %v1062, 0
      %v1488 = vsel %vm682, %v1063, 0
      %v1491 = vsel %vm682, %v1064, 0
      %v1494 = vsel %vm682, %v1065, 0
      %v1497 = vsel %vm682, %v1066, 0
      %v1500 = vsel %vm682, %v1067, 0
      %v1503 = vsel %vm682, %v1068, 0
      %v1506 = vsel %vm682, %v1069, 0
      %v1509 = vsel %vm682, %v1070, 0
      %v1512 = vsel %vm682, %v1071, 0
      %v1515 = vsel %vm682, %v1072, 0
      %v1518 = vsel %vm682, %v1073, 0
      %v1521 = vsel %vm682, %v1074, 0
      %v1524 = vsel %vm682, %v1075, 0
      %v1527 = vsel %vm682, %v1076, 0
      %v1530 = vsel %vm682, %v1077, 0
      %v1533 = vsel %vm682, %v1078, 0
      %v1536 = vsel %vm682, %v1079, 0
      %v1539 = vsel %vm1213, %v1081, 0
      %1541 = vmatprep.subr.mxu0 0.0
      %1542 = vmatpush1.msra.mxu0 %v1080
      %1543 = vmatprep.subr.mxu0 0.0
      %1544 = vmatpush1.msra.mxu0 %v1539
      %1545 = vmatprep.subr.mxu0 0.0
      %1546 = vmatpush1.msra.mxu0 0.0
      %1547 = vmatprep.subr.mxu0 0.0
      %1548 = vmatpush1.msra.mxu0 0.0
      %1549 = vmatprep.subr.mxu0 0.0
      %1550 = vmatpush1.msra.mxu0 0.0
      %1551 = vmatprep.subr.mxu0 0.0
      %1552 = vmatpush1.msra.mxu0 0.0
      %1553 = vmatprep.subr.mxu0 0.0
      %1554 = vmatpush1.msra.mxu0 0.0
      %1555 = vmatprep.subr.mxu0 0.0
      %1556 = vmatpush1.msra.mxu0 0.0
      %1557 = vmatprep.subr.mxu0 0.0
      %1558 = vmatpush1.msra.mxu0 0.0
      %1559 = vmatprep.subr.mxu0 0.0
      %1560 = vmatpush1.msra.mxu0 0.0
      %1561 = vmatprep.subr.mxu0 0.0
      %1562 = vmatpush1.msra.mxu0 0.0
      %1563 = vmatprep.subr.mxu0 0.0
      %1564 = vmatpush1.msra.mxu0 0.0
      %1565 = vmatprep.subr.mxu0 0.0
      %1566 = vmatpush1.msra.mxu0 0.0
      %1567 = vmatprep.subr.mxu0 0.0
      %1568 = vmatpush1.msra.mxu0 0.0
      %1569 = vmatprep.subr.mxu0 0.0
      %1570 = vmatpush1.msra.mxu0 0.0
      %1571 = vmatprep.subr.mxu0 0.0
      %1572 = vmatpush1.msra.mxu0 0.0
      %1573 = vmatprep.subr.mxu0 0.0
      %1574 = vmatpush1.msra.mxu0 0.0
      %1575 = vmatprep.subr.mxu0 0.0
      %1576 = vmatpush1.msra.mxu0 0.0
      %1577 = vmatprep.subr.mxu0 0.0
      %1578 = vmatpush1.msra.mxu0 0.0
      %1579 = vmatprep.subr.mxu0 0.0
      %1580 = vmatpush1.msra.mxu0 0.0
      %1581 = vmatprep.subr.mxu0 0.0
      %1582 = vmatpush1.msra.mxu0 0.0
      %1583 = vmatprep.subr.mxu0 0.0
      %1584 = vmatpush1.msra.mxu0 0.0
      %1585 = vmatprep.subr.mxu0 0.0
      %1586 = vmatpush1.msra.mxu0 0.0
      %1587 = vmatprep.subr.mxu0 0.0
      %1588 = vmatpush1.msra.mxu0 0.0
      %1589 = vmatprep.subr.mxu0 0.0
      %1590 = vmatpush1.msra.mxu0 0.0
      %1591 = vmatprep.subr.mxu0 0.0
      %1592 = vmatpush1.msra.mxu0 0.0
      %1593 = vmatprep.subr.mxu0 0.0
      %1594 = vmatpush1.msra.mxu0 0.0
      %1595 = vmatprep.subr.mxu0 0.0
      %1596 = vmatpush1.msra.mxu0 0.0
      %1597 = vmatprep.subr.mxu0 0.0
      %1598 = vmatpush1.msra.mxu0 0.0
      %1599 = vmatprep.subr.mxu0 0.0
      %1600 = vmatpush1.msra.mxu0 0.0
      %1601 = vmatprep.subr.mxu0 0.0
      %1602 = vmatpush1.msra.mxu0 0.0
      %1603 = vmatprep.subr.mxu0 0.0
      %1604 = vmatpush1.msra.mxu0 0.0
      %1605 = vmatprep.mubr.f32.mxu0 0.0
      %1606 = vmatmul.mubr.f32.gmra.mrb[0].mxu0 %v1443
      %v1607 = vpop.f32.mrb[0].mxu0
      %v1608 = vadd.f32 %v1284, %v1607
      %v1609 = vpop.f32.mrb[0].mxu0
      %1610 = vmatprep.mubr.f32.mxu0 0.0
      %1611 = vmatmul.mubr.f32.gmra.mrb[0].mxu0 %v1446
      %v1612 = vpop.f32.mrb[0].mxu0
      %v1613 = vadd.f32 %v1289, %v1612
      %v1614 = vpop.f32.mrb[0].mxu0
      %1615 = vmatprep.mubr.f32.mxu0 0.0
      %1616 = vmatmul.mubr.f32.gmra.mrb[0].mxu0 %v1449
      %v1617 = vpop.f32.mrb[0].mxu0
      %v1618 = vadd.f32 %v1294, %v1617
      %v1619 = vpop.f32.mrb[0].mxu0
      %1620 = vmatprep.mubr.f32.mxu0 0.0
      %1621 = vmatmul.mubr.f32.gmra.mrb[0].mxu0 %v1452
      %v1622 = vpop.f32.mrb[0].mxu0
      %v1623 = vadd.f32 %v1299, %v1622
      %v1624 = vpop.f32.mrb[0].mxu0
      %1625 = vmatprep.mubr.f32.mxu0 0.0
      %1626 = vmatmul.mubr.f32.gmra.mrb[0].mxu0 %v1455
      %v1627 = vpop.f32.mrb[0].mxu0
      %v1628 = vadd.f32 %v1304, %v1627
      %v1629 = vpop.f32.mrb[0].mxu0
      %1630 = vmatprep.mubr.f32.mxu0 0.0
      %1631 = vmatmul.mubr.f32.gmra.mrb[0].mxu0 %v1458
      %v1632 = vpop.f32.mrb[0].mxu0
      %v1633 = vadd.f32 %v1309, %v1632
      %v1634 = vpop.f32.mrb[0].mxu0
      %1635 = vmatprep.mubr.f32.mxu0 0.0
      %1636 = vmatmul.mubr.f32.gmra.mrb[0].mxu0 %v1461
      %v1637 = vpop.f32.mrb[0].mxu0
      %v1638 = vadd.f32 %v1314, %v1637
      %v1639 = vpop.f32.mrb[0].mxu0
      %1640 = vmatprep.mubr.f32.mxu0 0.0
      %1641 = vmatmul.mubr.f32.gmra.mrb[0].mxu0 %v1464
      %v1642 = vpop.f32.mrb[0].mxu0
      %v1643 = vadd.f32 %v1319, %v1642
      %v1644 = vpop.f32.mrb[0].mxu0
      %1645 = vmatprep.mubr.f32.mxu0 0.0
      %1646 = vmatmul.mubr.f32.gmra.mrb[0].mxu0 %v1467
      %v1647 = vpop.f32.mrb[0].mxu0
      %v1648 = vadd.f32 %v1324, %v1647
      %v1649 = vpop.f32.mrb[0].mxu0
      %1650 = vmatprep.mubr.f32.mxu0 0.0
      %1651 = vmatmul.mubr.f32.gmra.mrb[0].mxu0 %v1470
      %v1652 = vpop.f32.mrb[0].mxu0
      %v1653 = vadd.f32 %v1329, %v1652
      %v1654 = vpop.f32.mrb[0].mxu0
      %1655 = vmatprep.mubr.f32.mxu0 0.0
      %1656 = vmatmul.mubr.f32.gmra.mrb[0].mxu0 %v1473
      %v1657 = vpop.f32.mrb[0].mxu0
      %v1658 = vadd.f32 %v1334, %v1657
      %v1659 = vpop.f32.mrb[0].mxu0
      %1660 = vmatprep.mubr.f32.mxu0 0.0
      %1661 = vmatmul.mubr.f32.gmra.mrb[0].mxu0 %v1476
      %v1662 = vpop.f32.mrb[0].mxu0
      %v1663 = vadd.f32 %v1339, %v1662
      %v1664 = vpop.f32.mrb[0].mxu0
      %1665 = vmatprep.mubr.f32.mxu0 0.0
      %1666 = vmatmul.mubr.f32.gmra.mrb[0].mxu0 %v1479
      %v1667 = vpop.f32.mrb[0].mxu0
      %v1668 = vadd.f32 %v1344, %v1667
      %v1669 = vpop.f32.mrb[0].mxu0
      %1670 = vmatprep.mubr.f32.mxu0 0.0
      %1671 = vmatmul.mubr.f32.gmra.mrb[0].mxu0 %v1482
      %v1672 = vpop.f32.mrb[0].mxu0
      %v1673 = vadd.f32 %v1349, %v1672
      %v1674 = vpop.f32.mrb[0].mxu0
      %1675 = vmatprep.mubr.f32.mxu0 0.0
      %1676 = vmatmul.mubr.f32.gmra.mrb[0].mxu0 %v1485
      %v1677 = vpop.f32.mrb[0].mxu0
      %v1678 = vadd.f32 %v1354, %v1677
      %v1679 = vpop.f32.mrb[0].mxu0
      %1680 = vmatprep.mubr.f32.mxu0 0.0
      %1681 = vmatmul.mubr.f32.gmra.mrb[0].mxu0 %v1488
      %v1682 = vpop.f32.mrb[0].mxu0
      %v1683 = vadd.f32 %v1359, %v1682
      %v1684 = vpop.f32.mrb[0].mxu0
      %1685 = vmatprep.mubr.f32.mxu0 0.0
      %1686 = vmatmul.mubr.f32.gmra.mrb[0].mxu0 %v1491
      %v1687 = vpop.f32.mrb[0].mxu0
      %v1688 = vadd.f32 %v1364, %v1687
      %v1689 = vpop.f32.mrb[0].mxu0
      %1690 = vmatprep.mubr.f32.mxu0 0.0
      %1691 = vmatmul.mubr.f32.gmra.mrb[0].mxu0 %v1494
      %v1692 = vpop.f32.mrb[0].mxu0
      %v1693 = vadd.f32 %v1369, %v1692
      %v1694 = vpop.f32.mrb[0].mxu0
      %1695 = vmatprep.mubr.f32.mxu0 0.0
      %1696 = vmatmul.mubr.f32.gmra.mrb[0].mxu0 %v1497
      %v1697 = vpop.f32.mrb[0].mxu0
      %v1698 = vadd.f32 %v1374, %v1697
      %v1699 = vpop.f32.mrb[0].mxu0
      %1700 = vmatprep.mubr.f32.mxu0 0.0
      %1701 = vmatmul.mubr.f32.gmra.mrb[0].mxu0 %v1500
      %v1702 = vpop.f32.mrb[0].mxu0
      %v1703 = vadd.f32 %v1379, %v1702
      %v1704 = vpop.f32.mrb[0].mxu0
      %1705 = vmatprep.mubr.f32.mxu0 0.0
      %1706 = vmatmul.mubr.f32.gmra.mrb[0].mxu0 %v1503
      %v1707 = vpop.f32.mrb[0].mxu0
      %v1708 = vadd.f32 %v1384, %v1707
      %v1709 = vpop.f32.mrb[0].mxu0
      %1710 = vmatprep.mubr.f32.mxu0 0.0
      %1711 = vmatmul.mubr.f32.gmra.mrb[0].mxu0 %v1506
      %v1712 = vpop.f32.mrb[0].mxu0
      %v1713 = vadd.f32 %v1389, %v1712
      %v1714 = vpop.f32.mrb[0].mxu0
      %1715 = vmatprep.mubr.f32.mxu0 0.0
      %1716 = vmatmul.mubr.f32.gmra.mrb[0].mxu0 %v1509
      %v1717 = vpop.f32.mrb[0].mxu0
      %v1718 = vadd.f32 %v1394, %v1717
      %v1719 = vpop.f32.mrb[0].mxu0
      %1720 = vmatprep.mubr.f32.mxu0 0.0
      %1721 = vmatmul.mubr.f32.gmra.mrb[0].mxu0 %v1512
      %v1722 = vpop.f32.mrb[0].mxu0
      %v1723 = vadd.f32 %v1399, %v1722
      %v1724 = vpop.f32.mrb[0].mxu0
      %1725 = vmatprep.mubr.f32.mxu0 0.0
      %1726 = vmatmul.mubr.f32.gmra.mrb[0].mxu0 %v1515
      %v1727 = vpop.f32.mrb[0].mxu0
      %v1728 = vadd.f32 %v1404, %v1727
      %v1729 = vpop.f32.mrb[0].mxu0
      %1730 = vmatprep.mubr.f32.mxu0 0.0
      %1731 = vmatmul.mubr.f32.gmra.mrb[0].mxu0 %v1518
      %v1732 = vpop.f32.mrb[0].mxu0
      %v1733 = vadd.f32 %v1409, %v1732
      %v1734 = vpop.f32.mrb[0].mxu0
      %1735 = vmatprep.mubr.f32.mxu0 0.0
      %1736 = vmatmul.mubr.f32.gmra.mrb[0].mxu0 %v1521
      %v1737 = vpop.f32.mrb[0].mxu0
      %v1738 = vadd.f32 %v1414, %v1737
      %v1739 = vpop.f32.mrb[0].mxu0
      %1740 = vmatprep.mubr.f32.mxu0 0.0
      %1741 = vmatmul.mubr.f32.gmra.mrb[0].mxu0 %v1524
      %v1742 = vpop.f32.mrb[0].mxu0
      %v1743 = vadd.f32 %v1419, %v1742
      %v1744 = vpop.f32.mrb[0].mxu0
      %1745 = vmatprep.mubr.f32.mxu0 0.0
      %1746 = vmatmul.mubr.f32.gmra.mrb[0].mxu0 %v1527
      %v1747 = vpop.f32.mrb[0].mxu0
      %v1748 = vadd.f32 %v1424, %v1747
      %v1749 = vpop.f32.mrb[0].mxu0
      %1750 = vmatprep.mubr.f32.mxu0 0.0
      %1751 = vmatmul.mubr.f32.gmra.mrb[0].mxu0 %v1530
      %v1752 = vpop.f32.mrb[0].mxu0
      %v1753 = vadd.f32 %v1429, %v1752
      %v1754 = vpop.f32.mrb[0].mxu0
      %1755 = vmatprep.mubr.f32.mxu0 0.0
      %1756 = vmatmul.mubr.f32.gmra.mrb[0].mxu0 %v1533
      %v1757 = vpop.f32.mrb[0].mxu0
      %v1758 = vadd.f32 %v1434, %v1757
      %v1759 = vpop.f32.mrb[0].mxu0
      %1760 = vmatprep.mubr.f32.mxu0 0.0
      %1761 = vmatmul.mubr.f32.gmra.mrb[0].mxu0 %v1536
      %v1762 = vpop.f32.mrb[0].mxu0
      %v1763 = vadd.f32 %v1439, %v1762
      %v1764 = vpop.f32.mrb[0].mxu0
      %1765 = vdwg.mxu0
      %s1766 = scalar_lea.vmem [#allocation2], 32
      %v1767 = vld [vmem:[%s1766] sm:$0xff]
      %v1768 = vld [vmem:[%s1766 + $0x8] sm:$0xff]
      %v1769 = vld [vmem:[%s1766 + $0x10] sm:$0xff]
      %v1770 = vld [vmem:[%s1766 + $0x18] sm:$0xff]
      %v1771 = vld [vmem:[%s1766 + $0x20] sm:$0xff]
      %v1772 = vld [vmem:[%s1766 + $0x28] sm:$0xff]
      %v1773 = vld [vmem:[%s1766 + $0x30] sm:$0xff]
      %v1774 = vld [vmem:[%s1766 + $0x38] sm:$0xff]
      %v1775 = vld [vmem:[%s1766 + $0x40] sm:$0xff]
      %v1776 = vld [vmem:[%s1766 + $0x48] sm:$0xff]
      %v1777 = vld [vmem:[%s1766 + $0x50] sm:$0xff]
      %v1778 = vld [vmem:[%s1766 + $0x58] sm:$0xff]
      %v1779 = vld [vmem:[%s1766 + $0x60] sm:$0xff]
      %v1780 = vld [vmem:[%s1766 + $0x68] sm:$0xff]
      %v1781 = vld [vmem:[%s1766 + $0x70] sm:$0xff]
      %v1782 = vld [vmem:[%s1766 + $0x78] sm:$0xff]
      %v1783 = vld [vmem:[%s1766 + $0x80] sm:$0xff]
      %v1784 = vld [vmem:[%s1766 + $0x88] sm:$0xff]
      %v1785 = vld [vmem:[%s1766 + $0x90] sm:$0xff]
      %v1786 = vld [vmem:[%s1766 + $0x98] sm:$0xff]
      %v1787 = vld [vmem:[%s1766 + $0xa0] sm:$0xff]
      %v1788 = vld [vmem:[%s1766 + $0xa8] sm:$0xff]
      %v1789 = vld [vmem:[%s1766 + $0xb0] sm:$0xff]
      %v1790 = vld [vmem:[%s1766 + $0xb8] sm:$0xff]
      %v1791 = vld [vmem:[%s1766 + $0xc0] sm:$0xff]
      %v1792 = vld [vmem:[%s1766 + $0xc8] sm:$0xff]
      %v1793 = vld [vmem:[%s1766 + $0xd0] sm:$0xff]
      %v1794 = vld [vmem:[%s1766 + $0xd8] sm:$0xff]
      %v1795 = vld [vmem:[%s1766 + $0xe0] sm:$0xff]
      %v1796 = vld [vmem:[%s1766 + $0xe8] sm:$0xff]
      %v1797 = vld [vmem:[%s1766 + $0xf0] sm:$0xff]
      %v1798 = vld [vmem:[%s1766 + $0xf8] sm:$0xff]
      %s1799 = scalar_lea.vmem %s2, 32
      %v1800 = vld [vmem:[%s1799] sm:$0xff]
      %v1801 = vld [vmem:[%s1799 + $0x8] sm:$0xf]
      %v1803 = vsel %vm682, %v1767, 0
      %v1806 = vsel %vm682, %v1768, 0
      %v1809 = vsel %vm682, %v1769, 0
      %v1812 = vsel %vm682, %v1770, 0
      %v1815 = vsel %vm682, %v1771, 0
      %v1818 = vsel %vm682, %v1772, 0
      %v1821 = vsel %vm682, %v1773, 0
      %v1824 = vsel %vm682, %v1774, 0
      %v1827 = vsel %vm682, %v1775, 0
      %v1830 = vsel %vm682, %v1776, 0
      %v1833 = vsel %vm682, %v1777, 0
      %v1836 = vsel %vm682, %v1778, 0
      %v1839 = vsel %vm682, %v1779, 0
      %v1842 = vsel %vm682, %v1780, 0
      %v1845 = vsel %vm682, %v1781, 0
      %v1848 = vsel %vm682, %v1782, 0
      %v1851 = vsel %vm682, %v1783, 0
      %v1854 = vsel %vm682, %v1784, 0
      %v1857 = vsel %vm682, %v1785, 0
      %v1860 = vsel %vm682, %v1786, 0
      %v1863 = vsel %vm682, %v1787, 0
      %v1866 = vsel %vm682, %v1788, 0
      %v1869 = vsel %vm682, %v1789, 0
      %v1872 = vsel %vm682, %v1790, 0
      %v1875 = vsel %vm682, %v1791, 0
      %v1878 = vsel %vm682, %v1792, 0
      %v1881 = vsel %vm682, %v1793, 0
      %v1884 = vsel %vm682, %v1794, 0
      %v1887 = vsel %vm682, %v1795, 0
      %v1890 = vsel %vm682, %v1796, 0
      %v1893 = vsel %vm682, %v1797, 0
      %v1896 = vsel %vm682, %v1798, 0
      %v1899 = vsel %vm1213, %v1801, 0
      %1901 = vmatprep.subr.mxu0 0.0
      %1902 = vmatpush1.msra.mxu0 %v1800
      %1903 = vmatprep.subr.mxu0 0.0
      %1904 = vmatpush1.msra.mxu0 %v1899
      %1905 = vmatprep.subr.mxu0 0.0
      %1906 = vmatpush1.msra.mxu0 0.0
      %1907 = vmatprep.subr.mxu0 0.0
      %1908 = vmatpush1.msra.mxu0 0.0
      %1909 = vmatprep.subr.mxu0 0.0
      %1910 = vmatpush1.msra.mxu0 0.0
      %1911 = vmatprep.subr.mxu0 0.0
      %1912 = vmatpush1.msra.mxu0 0.0
      %1913 = vmatprep.subr.mxu0 0.0
      %1914 = vmatpush1.msra.mxu0 0.0
      %1915 = vmatprep.subr.mxu0 0.0
      %1916 = vmatpush1.msra.mxu0 0.0
      %1917 = vmatprep.subr.mxu0 0.0
      %1918 = vmatpush1.msra.mxu0 0.0
      %1919 = vmatprep.subr.mxu0 0.0
      %1920 = vmatpush1.msra.mxu0 0.0
      %1921 = vmatprep.subr.mxu0 0.0
      %1922 = vmatpush1.msra.mxu0 0.0
      %1923 = vmatprep.subr.mxu0 0.0
      %1924 = vmatpush1.msra.mxu0 0.0
      %1925 = vmatprep.subr.mxu0 0.0
      %1926 = vmatpush1.msra.mxu0 0.0
      %1927 = vmatprep.subr.mxu0 0.0
      %1928 = vmatpush1.msra.mxu0 0.0
      %1929 = vmatprep.subr.mxu0 0.0
      %1930 = vmatpush1.msra.mxu0 0.0
      %1931 = vmatprep.subr.mxu0 0.0
      %1932 = vmatpush1.msra.mxu0 0.0
      %1933 = vmatprep.subr.mxu0 0.0
      %1934 = vmatpush1.msra.mxu0 0.0
      %1935 = vmatprep.subr.mxu0 0.0
      %1936 = vmatpush1.msra.mxu0 0.0
      %1937 = vmatprep.subr.mxu0 0.0
      %1938 = vmatpush1.msra.mxu0 0.0
      %1939 = vmatprep.subr.mxu0 0.0
      %1940 = vmatpush1.msra.mxu0 0.0
      %1941 = vmatprep.subr.mxu0 0.0
      %1942 = vmatpush1.msra.mxu0 0.0
      %1943 = vmatprep.subr.mxu0 0.0
      %1944 = vmatpush1.msra.mxu0 0.0
      %1945 = vmatprep.subr.mxu0 0.0
      %1946 = vmatpush1.msra.mxu0 0.0
      %1947 = vmatprep.subr.mxu0 0.0
      %1948 = vmatpush1.msra.mxu0 0.0
      %1949 = vmatprep.subr.mxu0 0.0
      %1950 = vmatpush1.msra.mxu0 0.0
      %1951 = vmatprep.subr.mxu0 0.0
      %1952 = vmatpush1.msra.mxu0 0.0
      %1953 = vmatprep.subr.mxu0 0.0
      %1954 = vmatpush1.msra.mxu0 0.0
      %1955 = vmatprep.subr.mxu0 0.0
      %1956 = vmatpush1.msra.mxu0 0.0
      %1957 = vmatprep.subr.mxu0 0.0
      %1958 = vmatpush1.msra.mxu0 0.0
      %1959 = vmatprep.subr.mxu0 0.0
      %1960 = vmatpush1.msra.mxu0 0.0
      %1961 = vmatprep.subr.mxu0 0.0
      %1962 = vmatpush1.msra.mxu0 0.0
      %1963 = vmatprep.subr.mxu0 0.0
      %1964 = vmatpush1.msra.mxu0 0.0
      %1965 = vmatprep.mubr.f32.mxu0 0.0
      %1966 = vmatmul.mubr.f32.gmra.mrb[0].mxu0 %v1803
      %v1967 = vpop.f32.mrb[0].mxu0
      %v1968 = vadd.f32 0.0, %v1967
      %v1969 = vpop.f32.mrb[0].mxu0
      %1970 = vmatprep.mubr.f32.mxu0 0.0
      %1971 = vmatmul.mubr.f32.gmra.mrb[0].mxu0 %v1806
      %v1972 = vpop.f32.mrb[0].mxu0
      %v1973 = vadd.f32 0.0, %v1972
      %v1974 = vpop.f32.mrb[0].mxu0
      %1975 = vmatprep.mubr.f32.mxu0 0.0
      %1976 = vmatmul.mubr.f32.gmra.mrb[0].mxu0 %v1809
      %v1977 = vpop.f32.mrb[0].mxu0
      %v1978 = vadd.f32 0.0, %v1977
      %v1979 = vpop.f32.mrb[0].mxu0
      %1980 = vmatprep.mubr.f32.mxu0 0.0
      %1981 = vmatmul.mubr.f32.gmra.mrb[0].mxu0 %v1812
      %v1982 = vpop.f32.mrb[0].mxu0
      %v1983 = vadd.f32 0.0, %v1982
      %v1984 = vpop.f32.mrb[0].mxu0
      %1985 = vmatprep.mubr.f32.mxu0 0.0
      %1986 = vmatmul.mubr.f32.gmra.mrb[0].mxu0 %v1815
      %v1987 = vpop.f32.mrb[0].mxu0
      %v1988 = vadd.f32 0.0, %v1987
      %v1989 = vpop.f32.mrb[0].mxu0
      %1990 = vmatprep.mubr.f32.mxu0 0.0
      %1991 = vmatmul.mubr.f32.gmra.mrb[0].mxu0 %v1818
      %v1992 = vpop.f32.mrb[0].mxu0
      %v1993 = vadd.f32 0.0, %v1992
      %v1994 = vpop.f32.mrb[0].mxu0
      %1995 = vmatprep.mubr.f32.mxu0 0.0
      %1996 = vmatmul.mubr.f32.gmra.mrb[0].mxu0 %v1821
      %v1997 = vpop.f32.mrb[0].mxu0
      %v1998 = vadd.f32 0.0, %v1997
      %v1999 = vpop.f32.mrb[0].mxu0
      %2000 = vmatprep.mubr.f32.mxu0 0.0
      %2001 = vmatmul.mubr.f32.gmra.mrb[0].mxu0 %v1824
      %v2002 = vpop.f32.mrb[0].mxu0
      %v2003 = vadd.f32 0.0, %v2002
      %v2004 = vpop.f32.mrb[0].mxu0
      %2005 = vmatprep.mubr.f32.mxu0 0.0
      %2006 = vmatmul.mubr.f32.gmra.mrb[0].mxu0 %v1827
      %v2007 = vpop.f32.mrb[0].mxu0
      %v2008 = vadd.f32 0.0, %v2007
      %v2009 = vpop.f32.mrb[0].mxu0
      %2010 = vmatprep.mubr.f32.mxu0 0.0
      %2011 = vmatmul.mubr.f32.gmra.mrb[0].mxu0 %v1830
      %v2012 = vpop.f32.mrb[0].mxu0
      %v2013 = vadd.f32 0.0, %v2012
      %v2014 = vpop.f32.mrb[0].mxu0
      %2015 = vmatprep.mubr.f32.mxu0 0.0
      %2016 = vmatmul.mubr.f32.gmra.mrb[0].mxu0 %v1833
      %v2017 = vpop.f32.mrb[0].mxu0
      %v2018 = vadd.f32 0.0, %v2017
      %v2019 = vpop.f32.mrb[0].mxu0
      %2020 = vmatprep.mubr.f32.mxu0 0.0
      %2021 = vmatmul.mubr.f32.gmra.mrb[0].mxu0 %v1836
      %v2022 = vpop.f32.mrb[0].mxu0
      %v2023 = vadd.f32 0.0, %v2022
      %v2024 = vpop.f32.mrb[0].mxu0
      %2025 = vmatprep.mubr.f32.mxu0 0.0
      %2026 = vmatmul.mubr.f32.gmra.mrb[0].mxu0 %v1839
      %v2027 = vpop.f32.mrb[0].mxu0
      %v2028 = vadd.f32 0.0, %v2027
      %v2029 = vpop.f32.mrb[0].mxu0
      %2030 = vmatprep.mubr.f32.mxu0 0.0
      %2031 = vmatmul.mubr.f32.gmra.mrb[0].mxu0 %v1842
      %v2032 = vpop.f32.mrb[0].mxu0
      %v2033 = vadd.f32 0.0, %v2032
      %v2034 = vpop.f32.mrb[0].mxu0
      %2035 = vmatprep.mubr.f32.mxu0 0.0
      %2036 = vmatmul.mubr.f32.gmra.mrb[0].mxu0 %v1845
      %v2037 = vpop.f32.mrb[0].mxu0
      %v2038 = vadd.f32 0.0, %v2037
      %v2039 = vpop.f32.mrb[0].mxu0
      %2040 = vmatprep.mubr.f32.mxu0 0.0
      %2041 = vmatmul.mubr.f32.gmra.mrb[0].mxu0 %v1848
      %v2042 = vpop.f32.mrb[0].mxu0
      %v2043 = vadd.f32 0.0, %v2042
      %v2044 = vpop.f32.mrb[0].mxu0
      %2045 = vmatprep.mubr.f32.mxu0 0.0
      %2046 = vmatmul.mubr.f32.gmra.mrb[0].mxu0 %v1851
      %v2047 = vpop.f32.mrb[0].mxu0
      %v2048 = vadd.f32 0.0, %v2047
      %v2049 = vpop.f32.mrb[0].mxu0
      %2050 = vmatprep.mubr.f32.mxu0 0.0
      %2051 = vmatmul.mubr.f32.gmra.mrb[0].mxu0 %v1854
      %v2052 = vpop.f32.mrb[0].mxu0
      %v2053 = vadd.f32 0.0, %v2052
      %v2054 = vpop.f32.mrb[0].mxu0
      %2055 = vmatprep.mubr.f32.mxu0 0.0
      %2056 = vmatmul.mubr.f32.gmra.mrb[0].mxu0 %v1857
      %v2057 = vpop.f32.mrb[0].mxu0
      %v2058 = vadd.f32 0.0, %v2057
      %v2059 = vpop.f32.mrb[0].mxu0
      %2060 = vmatprep.mubr.f32.mxu0 0.0
      %2061 = vmatmul.mubr.f32.gmra.mrb[0].mxu0 %v1860
      %v2062 = vpop.f32.mrb[0].mxu0
      %v2063 = vadd.f32 0.0, %v2062
      %v2064 = vpop.f32.mrb[0].mxu0
      %2065 = vmatprep.mubr.f32.mxu0 0.0
      %2066 = vmatmul.mubr.f32.gmra.mrb[0].mxu0 %v1863
      %v2067 = vpop.f32.mrb[0].mxu0
      %v2068 = vadd.f32 0.0, %v2067
      %v2069 = vpop.f32.mrb[0].mxu0
      %2070 = vmatprep.mubr.f32.mxu0 0.0
      %2071 = vmatmul.mubr.f32.gmra.mrb[0].mxu0 %v1866
      %v2072 = vpop.f32.mrb[0].mxu0
      %v2073 = vadd.f32 0.0, %v2072
      %v2074 = vpop.f32.mrb[0].mxu0
      %2075 = vmatprep.mubr.f32.mxu0 0.0
      %2076 = vmatmul.mubr.f32.gmra.mrb[0].mxu0 %v1869
      %v2077 = vpop.f32.mrb[0].mxu0
      %v2078 = vadd.f32 0.0, %v2077
      %v2079 = vpop.f32.mrb[0].mxu0
      %2080 = vmatprep.mubr.f32.mxu0 0.0
      %2081 = vmatmul.mubr.f32.gmra.mrb[0].mxu0 %v1872
      %v2082 = vpop.f32.mrb[0].mxu0
      %v2083 = vadd.f32 0.0, %v2082
      %v2084 = vpop.f32.mrb[0].mxu0
      %2085 = vmatprep.mubr.f32.mxu0 0.0
      %2086 = vmatmul.mubr.f32.gmra.mrb[0].mxu0 %v1875
      %v2087 = vpop.f32.mrb[0].mxu0
      %v2088 = vadd.f32 0.0, %v2087
      %v2089 = vpop.f32.mrb[0].mxu0
      %2090 = vmatprep.mubr.f32.mxu0 0.0
      %2091 = vmatmul.mubr.f32.gmra.mrb[0].mxu0 %v1878
      %v2092 = vpop.f32.mrb[0].mxu0
      %v2093 = vadd.f32 0.0, %v2092
      %v2094 = vpop.f32.mrb[0].mxu0
      %2095 = vmatprep.mubr.f32.mxu0 0.0
      %2096 = vmatmul.mubr.f32.gmra.mrb[0].mxu0 %v1881
      %v2097 = vpop.f32.mrb[0].mxu0
      %v2098 = vadd.f32 0.0, %v2097
      %v2099 = vpop.f32.mrb[0].mxu0
      %2100 = vmatprep.mubr.f32.mxu0 0.0
      %2101 = vmatmul.mubr.f32.gmra.mrb[0].mxu0 %v1884
      %v2102 = vpop.f32.mrb[0].mxu0
      %v2103 = vadd.f32 0.0, %v2102
      %v2104 = vpop.f32.mrb[0].mxu0
      %2105 = vmatprep.mubr.f32.mxu0 0.0
      %2106 = vmatmul.mubr.f32.gmra.mrb[0].mxu0 %v1887
      %v2107 = vpop.f32.mrb[0].mxu0
      %v2108 = vadd.f32 0.0, %v2107
      %v2109 = vpop.f32.mrb[0].mxu0
      %2110 = vmatprep.mubr.f32.mxu0 0.0
      %2111 = vmatmul.mubr.f32.gmra.mrb[0].mxu0 %v1890
      %v2112 = vpop.f32.mrb[0].mxu0
      %v2113 = vadd.f32 0.0, %v2112
      %v2114 = vpop.f32.mrb[0].mxu0
      %2115 = vmatprep.mubr.f32.mxu0 0.0
      %2116 = vmatmul.mubr.f32.gmra.mrb[0].mxu0 %v1893
      %v2117 = vpop.f32.mrb[0].mxu0
      %v2118 = vadd.f32 0.0, %v2117
      %v2119 = vpop.f32.mrb[0].mxu0
      %2120 = vmatprep.mubr.f32.mxu0 0.0
      %2121 = vmatmul.mubr.f32.gmra.mrb[0].mxu0 %v1896
      %v2122 = vpop.f32.mrb[0].mxu0
      %v2123 = vadd.f32 0.0, %v2122
      %v2124 = vpop.f32.mrb[0].mxu0
      %2125 = vdwg.mxu0
      %v2126 = vadd.f32 %v1608, %v1968
      %v2127 = vadd.f32 %v1613, %v1973
      %v2128 = vadd.f32 %v1618, %v1978
      %v2129 = vadd.f32 %v1623, %v1983
      %v2130 = vadd.f32 %v1628, %v1988
      %v2131 = vadd.f32 %v1633, %v1993
      %v2132 = vadd.f32 %v1638, %v1998
      %v2133 = vadd.f32 %v1643, %v2003
      %v2134 = vadd.f32 %v1648, %v2008
      %v2135 = vadd.f32 %v1653, %v2013
      %v2136 = vadd.f32 %v1658, %v2018
      %v2137 = vadd.f32 %v1663, %v2023
      %v2138 = vadd.f32 %v1668, %v2028
      %v2139 = vadd.f32 %v1673, %v2033
      %v2140 = vadd.f32 %v1678, %v2038
      %v2141 = vadd.f32 %v1683, %v2043
      %v2142 = vadd.f32 %v1688, %v2048
      %v2143 = vadd.f32 %v1693, %v2053
      %v2144 = vadd.f32 %v1698, %v2058
      %v2145 = vadd.f32 %v1703, %v2063
      %v2146 = vadd.f32 %v1708, %v2068
      %v2147 = vadd.f32 %v1713, %v2073
      %v2148 = vadd.f32 %v1718, %v2078
      %v2149 = vadd.f32 %v1723, %v2083
      %v2150 = vadd.f32 %v1728, %v2088
      %v2151 = vadd.f32 %v1733, %v2093
      %v2152 = vadd.f32 %v1738, %v2098
      %v2153 = vadd.f32 %v1743, %v2103
      %v2154 = vadd.f32 %v1748, %v2108
      %v2155 = vadd.f32 %v1753, %v2113
      %v2156 = vadd.f32 %v1758, %v2118
      %v2157 = vadd.f32 %v1763, %v2123
      %v2158 = vld [vmem:[%s4 + $0x1] sm:$0x1]
      %v2159 = vlaneseq
      %v2160 = vshrl.u32 %v2159, 7
      %v2161 = vsub.s32 0, %v2160
      %v2162 = vrot.slane %v2158, %v2161
      %vm2163 = vcmp.ge.f32.partialorder %v2126, %v2162
      %vm2164 = vcmp.ge.f32.partialorder %v2127, %v2162
      %vm2165 = vcmp.ge.f32.partialorder %v2128, %v2162
      %vm2166 = vcmp.ge.f32.partialorder %v2129, %v2162
      %vm2167 = vcmp.ge.f32.partialorder %v2130, %v2162
      %vm2168 = vcmp.ge.f32.partialorder %v2131, %v2162
      %vm2169 = vcmp.ge.f32.partialorder %v2132, %v2162
      %vm2170 = vcmp.ge.f32.partialorder %v2133, %v2162
      %vm2171 = vcmp.ge.f32.partialorder %v2134, %v2162
      %vm2172 = vcmp.ge.f32.partialorder %v2135, %v2162
      %vm2173 = vcmp.ge.f32.partialorder %v2136, %v2162
      %vm2174 = vcmp.ge.f32.partialorder %v2137, %v2162
      %vm2175 = vcmp.ge.f32.partialorder %v2138, %v2162
      %vm2176 = vcmp.ge.f32.partialorder %v2139, %v2162
      %vm2177 = vcmp.ge.f32.partialorder %v2140, %v2162
      %vm2178 = vcmp.ge.f32.partialorder %v2141, %v2162
      %vm2179 = vcmp.ge.f32.partialorder %v2142, %v2162
      %vm2180 = vcmp.ge.f32.partialorder %v2143, %v2162
      %vm2181 = vcmp.ge.f32.partialorder %v2144, %v2162
      %vm2182 = vcmp.ge.f32.partialorder %v2145, %v2162
      %vm2183 = vcmp.ge.f32.partialorder %v2146, %v2162
      %vm2184 = vcmp.ge.f32.partialorder %v2147, %v2162
      %vm2185 = vcmp.ge.f32.partialorder %v2148, %v2162
      %vm2186 = vcmp.ge.f32.partialorder %v2149, %v2162
      %vm2187 = vcmp.ge.f32.partialorder %v2150, %v2162
      %vm2188 = vcmp.ge.f32.partialorder %v2151, %v2162
      %vm2189 = vcmp.ge.f32.partialorder %v2152, %v2162
      %vm2190 = vcmp.ge.f32.partialorder %v2153, %v2162
      %vm2191 = vcmp.ge.f32.partialorder %v2154, %v2162
      %vm2192 = vcmp.ge.f32.partialorder %v2155, %v2162
      %vm2193 = vcmp.ge.f32.partialorder %v2156, %v2162
      %vm2194 = vcmp.ge.f32.partialorder %v2157, %v2162
      %v2195 = vsel %vm2163, 1, 0
      %v2196 = vsel %vm2164, 1, 0
      %v2197 = vsel %vm2165, 1, 0
      %v2198 = vsel %vm2166, 1, 0
      %v2199 = vsel %vm2167, 1, 0
      %v2200 = vsel %vm2168, 1, 0
      %v2201 = vsel %vm2169, 1, 0
      %v2202 = vsel %vm2170, 1, 0
      %v2203 = vsel %vm2171, 1, 0
      %v2204 = vsel %vm2172, 1, 0
      %v2205 = vsel %vm2173, 1, 0
      %v2206 = vsel %vm2174, 1, 0
      %v2207 = vsel %vm2175, 1, 0
      %v2208 = vsel %vm2176, 1, 0
      %v2209 = vsel %vm2177, 1, 0
      %v2210 = vsel %vm2178, 1, 0
      %v2211 = vsel %vm2179, 1, 0
      %v2212 = vsel %vm2180, 1, 0
      %v2213 = vsel %vm2181, 1, 0
      %v2214 = vsel %vm2182, 1, 0
      %v2215 = vsel %vm2183, 1, 0
      %v2216 = vsel %vm2184, 1, 0
      %v2217 = vsel %vm2185, 1, 0
      %v2218 = vsel %vm2186, 1, 0
      %v2219 = vsel %vm2187, 1, 0
      %v2220 = vsel %vm2188, 1, 0
      %v2221 = vsel %vm2189, 1, 0
      %v2222 = vsel %vm2190, 1, 0
      %v2223 = vsel %vm2191, 1, 0
      %v2224 = vsel %vm2192, 1, 0
      %v2225 = vsel %vm2193, 1, 0
      %v2226 = vsel %vm2194, 1, 0
      %v2227 = vcvt.s32.f32 %v2195
      %v2228 = vcvt.s32.f32 %v2196
      %v2229 = vcvt.s32.f32 %v2197
      %v2230 = vcvt.s32.f32 %v2198
      %v2231 = vcvt.s32.f32 %v2199
      %v2232 = vcvt.s32.f32 %v2200
      %v2233 = vcvt.s32.f32 %v2201
      %v2234 = vcvt.s32.f32 %v2202
      %v2235 = vcvt.s32.f32 %v2203
      %v2236 = vcvt.s32.f32 %v2204
      %v2237 = vcvt.s32.f32 %v2205
      %v2238 = vcvt.s32.f32 %v2206
      %v2239 = vcvt.s32.f32 %v2207
      %v2240 = vcvt.s32.f32 %v2208
      %v2241 = vcvt.s32.f32 %v2209
      %v2242 = vcvt.s32.f32 %v2210
      %v2243 = vcvt.s32.f32 %v2211
      %v2244 = vcvt.s32.f32 %v2212
      %v2245 = vcvt.s32.f32 %v2213
      %v2246 = vcvt.s32.f32 %v2214
      %v2247 = vcvt.s32.f32 %v2215
      %v2248 = vcvt.s32.f32 %v2216
      %v2249 = vcvt.s32.f32 %v2217
      %v2250 = vcvt.s32.f32 %v2218
      %v2251 = vcvt.s32.f32 %v2219
      %v2252 = vcvt.s32.f32 %v2220
      %v2253 = vcvt.s32.f32 %v2221
      %v2254 = vcvt.s32.f32 %v2222
      %v2255 = vcvt.s32.f32 %v2223
      %v2256 = vcvt.s32.f32 %v2224
      %v2257 = vcvt.s32.f32 %v2225
      %v2258 = vcvt.s32.f32 %v2226
      %v2259 = vld [vmem:[%s3] sm:$0xf]
      %v2261 = vsel %vm723, %v2227, 0
      %v2264 = vsel %vm723, %v2228, 0
      %v2267 = vsel %vm723, %v2229, 0
      %v2270 = vsel %vm723, %v2230, 0
      %v2273 = vsel %vm723, %v2231, 0
      %v2276 = vsel %vm723, %v2232, 0
      %v2279 = vsel %vm723, %v2233, 0
      %v2282 = vsel %vm723, %v2234, 0
      %v2285 = vsel %vm723, %v2235, 0
      %v2288 = vsel %vm723, %v2236, 0
      %v2291 = vsel %vm723, %v2237, 0
      %v2294 = vsel %vm723, %v2238, 0
      %v2297 = vsel %vm723, %v2239, 0
      %v2300 = vsel %vm723, %v2240, 0
      %v2303 = vsel %vm723, %v2241, 0
      %v2306 = vsel %vm723, %v2242, 0
      %v2309 = vsel %vm723, %v2243, 0
      %v2312 = vsel %vm723, %v2244, 0
      %v2315 = vsel %vm723, %v2245, 0
      %v2318 = vsel %vm723, %v2246, 0
      %v2321 = vsel %vm723, %v2247, 0
      %v2324 = vsel %vm723, %v2248, 0
      %v2327 = vsel %vm723, %v2249, 0
      %v2330 = vsel %vm723, %v2250, 0
      %v2333 = vsel %vm723, %v2251, 0
      %v2336 = vsel %vm723, %v2252, 0
      %v2339 = vsel %vm723, %v2253, 0
      %v2342 = vsel %vm723, %v2254, 0
      %v2345 = vsel %vm723, %v2255, 0
      %v2348 = vsel %vm723, %v2256, 0
      %v2351 = vsel %vm723, %v2257, 0
      %v2354 = vsel %vm723, %v2258, 0
      %v2357 = vsel %vm1213, %v2259, 0
      %2359 = vmatprep.subr.mxu0 0.0
      %2360 = vmatpush1.msra.mxu0 %v2357
      %2361 = vmatprep.subr.mxu0 0.0
      %2362 = vmatpush1.msra.mxu0 0.0
      %2363 = vmatprep.subr.mxu0 0.0
      %2364 = vmatpush1.msra.mxu0 0.0
      %2365 = vmatprep.subr.mxu0 0.0
      %2366 = vmatpush1.msra.mxu0 0.0
      %2367 = vmatprep.subr.mxu0 0.0
      %2368 = vmatpush1.msra.mxu0 0.0
      %2369 = vmatprep.subr.mxu0 0.0
      %2370 = vmatpush1.msra.mxu0 0.0
      %2371 = vmatprep.subr.mxu0 0.0
      %2372 = vmatpush1.msra.mxu0 0.0
      %2373 = vmatprep.subr.mxu0 0.0
      %2374 = vmatpush1.msra.mxu0 0.0
      %2375 = vmatprep.subr.mxu0 0.0
      %2376 = vmatpush1.msra.mxu0 0.0
      %2377 = vmatprep.subr.mxu0 0.0
      %2378 = vmatpush1.msra.mxu0 0.0
      %2379 = vmatprep.subr.mxu0 0.0
      %2380 = vmatpush1.msra.mxu0 0.0
      %2381 = vmatprep.subr.mxu0 0.0
      %2382 = vmatpush1.msra.mxu0 0.0
      %2383 = vmatprep.subr.mxu0 0.0
      %2384 = vmatpush1.msra.mxu0 0.0
      %2385 = vmatprep.subr.mxu0 0.0
      %2386 = vmatpush1.msra.mxu0 0.0
      %2387 = vmatprep.subr.mxu0 0.0
      %2388 = vmatpush1.msra.mxu0 0.0
      %2389 = vmatprep.subr.mxu0 0.0
      %2390 = vmatpush1.msra.mxu0 0.0
      %2391 = vmatprep.subr.mxu0 0.0
      %2392 = vmatpush1.msra.mxu0 0.0
      %2393 = vmatprep.subr.mxu0 0.0
      %2394 = vmatpush1.msra.mxu0 0.0
      %2395 = vmatprep.subr.mxu0 0.0
      %2396 = vmatpush1.msra.mxu0 0.0
      %2397 = vmatprep.subr.mxu0 0.0
      %2398 = vmatpush1.msra.mxu0 0.0
      %2399 = vmatprep.subr.mxu0 0.0
      %2400 = vmatpush1.msra.mxu0 0.0
      %2401 = vmatprep.subr.mxu0 0.0
      %2402 = vmatpush1.msra.mxu0 0.0
      %2403 = vmatprep.subr.mxu0 0.0
      %2404 = vmatpush1.msra.mxu0 0.0
      %2405 = vmatprep.subr.mxu0 0.0
      %2406 = vmatpush1.msra.mxu0 0.0
      %2407 = vmatprep.subr.mxu0 0.0
      %2408 = vmatpush1.msra.mxu0 0.0
      %2409 = vmatprep.subr.mxu0 0.0
      %2410 = vmatpush1.msra.mxu0 0.0
      %2411 = vmatprep.subr.mxu0 0.0
      %2412 = vmatpush1.msra.mxu0 0.0
      %2413 = vmatprep.subr.mxu0 0.0
      %2414 = vmatpush1.msra.mxu0 0.0
      %2415 = vmatprep.subr.mxu0 0.0
      %2416 = vmatpush1.msra.mxu0 0.0
      %2417 = vmatprep.subr.mxu0 0.0
      %2418 = vmatpush1.msra.mxu0 0.0
      %2419 = vmatprep.subr.mxu0 0.0
      %2420 = vmatpush1.msra.mxu0 0.0
      %2421 = vmatprep.subr.mxu0 0.0
      %2422 = vmatpush1.msra.mxu0 0.0
      %2423 = vmatprep.mubr.f32.mxu0 0.0
      %2424 = vmatmul.mubr.f32.gmra.mrb[0].mxu0 %v2261
      %v2425 = vpop.f32.mrb[0].mxu0
      %v2426 = vadd.f32 0.0, %v2425
      %v2427 = vpop.f32.mrb[0].mxu0
      %2428 = vmatprep.mubr.f32.mxu0 0.0
      %2429 = vmatmul.mubr.f32.gmra.mrb[0].mxu0 %v2264
      %v2430 = vpop.f32.mrb[0].mxu0
      %v2431 = vadd.f32 0.0, %v2430
      %v2432 = vpop.f32.mrb[0].mxu0
      %2433 = vmatprep.mubr.f32.mxu0 0.0
      %2434 = vmatmul.mubr.f32.gmra.mrb[0].mxu0 %v2267
      %v2435 = vpop.f32.mrb[0].mxu0
      %v2436 = vadd.f32 0.0, %v2435
      %v2437 = vpop.f32.mrb[0].mxu0
      %2438 = vmatprep.mubr.f32.mxu0 0.0
      %2439 = vmatmul.mubr.f32.gmra.mrb[0].mxu0 %v2270
      %v2440 = vpop.f32.mrb[0].mxu0
      %v2441 = vadd.f32 0.0, %v2440
      %v2442 = vpop.f32.mrb[0].mxu0
      %2443 = vmatprep.mubr.f32.mxu0 0.0
      %2444 = vmatmul.mubr.f32.gmra.mrb[0].mxu0 %v2273
      %v2445 = vpop.f32.mrb[0].mxu0
      %v2446 = vadd.f32 0.0, %v2445
      %v2447 = vpop.f32.mrb[0].mxu0
      %2448 = vmatprep.mubr.f32.mxu0 0.0
      %2449 = vmatmul.mubr.f32.gmra.mrb[0].mxu0 %v2276
      %v2450 = vpop.f32.mrb[0].mxu0
      %v2451 = vadd.f32 0.0, %v2450
      %v2452 = vpop.f32.mrb[0].mxu0
      %2453 = vmatprep.mubr.f32.mxu0 0.0
      %2454 = vmatmul.mubr.f32.gmra.mrb[0].mxu0 %v2279
      %v2455 = vpop.f32.mrb[0].mxu0
      %v2456 = vadd.f32 0.0, %v2455
      %v2457 = vpop.f32.mrb[0].mxu0
      %2458 = vmatprep.mubr.f32.mxu0 0.0
      %2459 = vmatmul.mubr.f32.gmra.mrb[0].mxu0 %v2282
      %v2460 = vpop.f32.mrb[0].mxu0
      %v2461 = vadd.f32 0.0, %v2460
      %v2462 = vpop.f32.mrb[0].mxu0
      %2463 = vmatprep.mubr.f32.mxu0 0.0
      %2464 = vmatmul.mubr.f32.gmra.mrb[0].mxu0 %v2285
      %v2465 = vpop.f32.mrb[0].mxu0
      %v2466 = vadd.f32 0.0, %v2465
      %v2467 = vpop.f32.mrb[0].mxu0
      %2468 = vmatprep.mubr.f32.mxu0 0.0
      %2469 = vmatmul.mubr.f32.gmra.mrb[0].mxu0 %v2288
      %v2470 = vpop.f32.mrb[0].mxu0
      %v2471 = vadd.f32 0.0, %v2470
      %v2472 = vpop.f32.mrb[0].mxu0
      %2473 = vmatprep.mubr.f32.mxu0 0.0
      %2474 = vmatmul.mubr.f32.gmra.mrb[0].mxu0 %v2291
      %v2475 = vpop.f32.mrb[0].mxu0
      %v2476 = vadd.f32 0.0, %v2475
      %v2477 = vpop.f32.mrb[0].mxu0
      %2478 = vmatprep.mubr.f32.mxu0 0.0
      %2479 = vmatmul.mubr.f32.gmra.mrb[0].mxu0 %v2294
      %v2480 = vpop.f32.mrb[0].mxu0
      %v2481 = vadd.f32 0.0, %v2480
      %v2482 = vpop.f32.mrb[0].mxu0
      %2483 = vmatprep.mubr.f32.mxu0 0.0
      %2484 = vmatmul.mubr.f32.gmra.mrb[0].mxu0 %v2297
      %v2485 = vpop.f32.mrb[0].mxu0
      %v2486 = vadd.f32 0.0, %v2485
      %v2487 = vpop.f32.mrb[0].mxu0
      %2488 = vmatprep.mubr.f32.mxu0 0.0
      %2489 = vmatmul.mubr.f32.gmra.mrb[0].mxu0 %v2300
      %v2490 = vpop.f32.mrb[0].mxu0
      %v2491 = vadd.f32 0.0, %v2490
      %v2492 = vpop.f32.mrb[0].mxu0
      %2493 = vmatprep.mubr.f32.mxu0 0.0
      %2494 = vmatmul.mubr.f32.gmra.mrb[0].mxu0 %v2303
      %v2495 = vpop.f32.mrb[0].mxu0
      %v2496 = vadd.f32 0.0, %v2495
      %v2497 = vpop.f32.mrb[0].mxu0
      %2498 = vmatprep.mubr.f32.mxu0 0.0
      %2499 = vmatmul.mubr.f32.gmra.mrb[0].mxu0 %v2306
      %v2500 = vpop.f32.mrb[0].mxu0
      %v2501 = vadd.f32 0.0, %v2500
      %v2502 = vpop.f32.mrb[0].mxu0
      %2503 = vmatprep.mubr.f32.mxu0 0.0
      %2504 = vmatmul.mubr.f32.gmra.mrb[0].mxu0 %v2309
      %v2505 = vpop.f32.mrb[0].mxu0
      %v2506 = vadd.f32 0.0, %v2505
      %v2507 = vpop.f32.mrb[0].mxu0
      %2508 = vmatprep.mubr.f32.mxu0 0.0
      %2509 = vmatmul.mubr.f32.gmra.mrb[0].mxu0 %v2312
      %v2510 = vpop.f32.mrb[0].mxu0
      %v2511 = vadd.f32 0.0, %v2510
      %v2512 = vpop.f32.mrb[0].mxu0
      %2513 = vmatprep.mubr.f32.mxu0 0.0
      %2514 = vmatmul.mubr.f32.gmra.mrb[0].mxu0 %v2315
      %v2515 = vpop.f32.mrb[0].mxu0
      %v2516 = vadd.f32 0.0, %v2515
      %v2517 = vpop.f32.mrb[0].mxu0
      %2518 = vmatprep.mubr.f32.mxu0 0.0
      %2519 = vmatmul.mubr.f32.gmra.mrb[0].mxu0 %v2318
      %v2520 = vpop.f32.mrb[0].mxu0
      %v2521 = vadd.f32 0.0, %v2520
      %v2522 = vpop.f32.mrb[0].mxu0
      %2523 = vmatprep.mubr.f32.mxu0 0.0
      %2524 = vmatmul.mubr.f32.gmra.mrb[0].mxu0 %v2321
      %v2525 = vpop.f32.mrb[0].mxu0
      %v2526 = vadd.f32 0.0, %v2525
      %v2527 = vpop.f32.mrb[0].mxu0
      %2528 = vmatprep.mubr.f32.mxu0 0.0
      %2529 = vmatmul.mubr.f32.gmra.mrb[0].mxu0 %v2324
      %v2530 = vpop.f32.mrb[0].mxu0
      %v2531 = vadd.f32 0.0, %v2530
      %v2532 = vpop.f32.mrb[0].mxu0
      %2533 = vmatprep.mubr.f32.mxu0 0.0
      %2534 = vmatmul.mubr.f32.gmra.mrb[0].mxu0 %v2327
      %v2535 = vpop.f32.mrb[0].mxu0
      %v2536 = vadd.f32 0.0, %v2535
      %v2537 = vpop.f32.mrb[0].mxu0
      %2538 = vmatprep.mubr.f32.mxu0 0.0
      %2539 = vmatmul.mubr.f32.gmra.mrb[0].mxu0 %v2330
      %v2540 = vpop.f32.mrb[0].mxu0
      %v2541 = vadd.f32 0.0, %v2540
      %v2542 = vpop.f32.mrb[0].mxu0
      %2543 = vmatprep.mubr.f32.mxu0 0.0
      %2544 = vmatmul.mubr.f32.gmra.mrb[0].mxu0 %v2333
      %v2545 = vpop.f32.mrb[0].mxu0
      %v2546 = vadd.f32 0.0, %v2545
      %v2547 = vpop.f32.mrb[0].mxu0
      %2548 = vmatprep.mubr.f32.mxu0 0.0
      %2549 = vmatmul.mubr.f32.gmra.mrb[0].mxu0 %v2336
      %v2550 = vpop.f32.mrb[0].mxu0
      %v2551 = vadd.f32 0.0, %v2550
      %v2552 = vpop.f32.mrb[0].mxu0
      %2553 = vmatprep.mubr.f32.mxu0 0.0
      %2554 = vmatmul.mubr.f32.gmra.mrb[0].mxu0 %v2339
      %v2555 = vpop.f32.mrb[0].mxu0
      %v2556 = vadd.f32 0.0, %v2555
      %v2557 = vpop.f32.mrb[0].mxu0
      %2558 = vmatprep.mubr.f32.mxu0 0.0
      %2559 = vmatmul.mubr.f32.gmra.mrb[0].mxu0 %v2342
      %v2560 = vpop.f32.mrb[0].mxu0
      %v2561 = vadd.f32 0.0, %v2560
      %v2562 = vpop.f32.mrb[0].mxu0
      %2563 = vmatprep.mubr.f32.mxu0 0.0
      %2564 = vmatmul.mubr.f32.gmra.mrb[0].mxu0 %v2345
      %v2565 = vpop.f32.mrb[0].mxu0
      %v2566 = vadd.f32 0.0, %v2565
      %v2567 = vpop.f32.mrb[0].mxu0
      %2568 = vmatprep.mubr.f32.mxu0 0.0
      %2569 = vmatmul.mubr.f32.gmra.mrb[0].mxu0 %v2348
      %v2570 = vpop.f32.mrb[0].mxu0
      %v2571 = vadd.f32 0.0, %v2570
      %v2572 = vpop.f32.mrb[0].mxu0
      %2573 = vmatprep.mubr.f32.mxu0 0.0
      %2574 = vmatmul.mubr.f32.gmra.mrb[0].mxu0 %v2351
      %v2575 = vpop.f32.mrb[0].mxu0
      %v2576 = vadd.f32 0.0, %v2575
      %v2577 = vpop.f32.mrb[0].mxu0
      %2578 = vmatprep.mubr.f32.mxu0 0.0
      %2579 = vmatmul.mubr.f32.gmra.mrb[0].mxu0 %v2354
      %v2580 = vpop.f32.mrb[0].mxu0
      %v2581 = vadd.f32 0.0, %v2580
      %v2582 = vpop.f32.mrb[0].mxu0
      %2583 = vdwg.mxu0
      %v2584 = vld [vmem:[%s4 + $0x2] sm:$0x1]
      %v2585 = vlaneseq
      %v2586 = vshrl.u32 %v2585, 7
      %v2587 = vsub.s32 0, %v2586
      %v2588 = vrot.slane %v2584, %v2587
      %vm2589 = vcmp.ge.f32.partialorder %v2426, %v2588
      %vm2590 = vcmp.ge.f32.partialorder %v2431, %v2588
      %vm2591 = vcmp.ge.f32.partialorder %v2436, %v2588
      %vm2592 = vcmp.ge.f32.partialorder %v2441, %v2588
      %vm2593 = vcmp.ge.f32.partialorder %v2446, %v2588
      %vm2594 = vcmp.ge.f32.partialorder %v2451, %v2588
      %vm2595 = vcmp.ge.f32.partialorder %v2456, %v2588
      %vm2596 = vcmp.ge.f32.partialorder %v2461, %v2588
      %vm2597 = vcmp.ge.f32.partialorder %v2466, %v2588
      %vm2598 = vcmp.ge.f32.partialorder %v2471, %v2588
      %vm2599 = vcmp.ge.f32.partialorder %v2476, %v2588
      %vm2600 = vcmp.ge.f32.partialorder %v2481, %v2588
      %vm2601 = vcmp.ge.f32.partialorder %v2486, %v2588
      %vm2602 = vcmp.ge.f32.partialorder %v2491, %v2588
      %vm2603 = vcmp.ge.f32.partialorder %v2496, %v2588
      %vm2604 = vcmp.ge.f32.partialorder %v2501, %v2588
      %vm2605 = vcmp.ge.f32.partialorder %v2506, %v2588
      %vm2606 = vcmp.ge.f32.partialorder %v2511, %v2588
      %vm2607 = vcmp.ge.f32.partialorder %v2516, %v2588
      %vm2608 = vcmp.ge.f32.partialorder %v2521, %v2588
      %vm2609 = vcmp.ge.f32.partialorder %v2526, %v2588
      %vm2610 = vcmp.ge.f32.partialorder %v2531, %v2588
      %vm2611 = vcmp.ge.f32.partialorder %v2536, %v2588
      %vm2612 = vcmp.ge.f32.partialorder %v2541, %v2588
      %vm2613 = vcmp.ge.f32.partialorder %v2546, %v2588
      %vm2614 = vcmp.ge.f32.partialorder %v2551, %v2588
      %vm2615 = vcmp.ge.f32.partialorder %v2556, %v2588
      %vm2616 = vcmp.ge.f32.partialorder %v2561, %v2588
      %vm2617 = vcmp.ge.f32.partialorder %v2566, %v2588
      %vm2618 = vcmp.ge.f32.partialorder %v2571, %v2588
      %vm2619 = vcmp.ge.f32.partialorder %v2576, %v2588
      %vm2620 = vcmp.ge.f32.partialorder %v2581, %v2588
      %v2621 = vsel %vm2589, 1, 0
      %v2622 = vsel %vm2590, 1, 0
      %v2623 = vsel %vm2591, 1, 0
      %v2624 = vsel %vm2592, 1, 0
      %v2625 = vsel %vm2593, 1, 0
      %v2626 = vsel %vm2594, 1, 0
      %v2627 = vsel %vm2595, 1, 0
      %v2628 = vsel %vm2596, 1, 0
      %v2629 = vsel %vm2597, 1, 0
      %v2630 = vsel %vm2598, 1, 0
      %v2631 = vsel %vm2599, 1, 0
      %v2632 = vsel %vm2600, 1, 0
      %v2633 = vsel %vm2601, 1, 0
      %v2634 = vsel %vm2602, 1, 0
      %v2635 = vsel %vm2603, 1, 0
      %v2636 = vsel %vm2604, 1, 0
      %v2637 = vsel %vm2605, 1, 0
      %v2638 = vsel %vm2606, 1, 0
      %v2639 = vsel %vm2607, 1, 0
      %v2640 = vsel %vm2608, 1, 0
      %v2641 = vsel %vm2609, 1, 0
      %v2642 = vsel %vm2610, 1, 0
      %v2643 = vsel %vm2611, 1, 0
      %v2644 = vsel %vm2612, 1, 0
      %v2645 = vsel %vm2613, 1, 0
      %v2646 = vsel %vm2614, 1, 0
      %v2647 = vsel %vm2615, 1, 0
      %v2648 = vsel %vm2616, 1, 0
      %v2649 = vsel %vm2617, 1, 0
      %v2650 = vsel %vm2618, 1, 0
      %v2651 = vsel %vm2619, 1, 0
      %v2652 = vsel %vm2620, 1, 0
      %v2653 = vcvt.s32.f32 %v2621
      %v2654 = vcvt.s32.f32 %v2622
      %v2655 = vcvt.s32.f32 %v2623
      %v2656 = vcvt.s32.f32 %v2624
      %v2657 = vcvt.s32.f32 %v2625
      %v2658 = vcvt.s32.f32 %v2626
      %v2659 = vcvt.s32.f32 %v2627
      %v2660 = vcvt.s32.f32 %v2628
      %v2661 = vcvt.s32.f32 %v2629
      %v2662 = vcvt.s32.f32 %v2630
      %v2663 = vcvt.s32.f32 %v2631
      %v2664 = vcvt.s32.f32 %v2632
      %v2665 = vcvt.s32.f32 %v2633
      %v2666 = vcvt.s32.f32 %v2634
      %v2667 = vcvt.s32.f32 %v2635
      %v2668 = vcvt.s32.f32 %v2636
      %v2669 = vcvt.s32.f32 %v2637
      %v2670 = vcvt.s32.f32 %v2638
      %v2671 = vcvt.s32.f32 %v2639
      %v2672 = vcvt.s32.f32 %v2640
      %v2673 = vcvt.s32.f32 %v2641
      %v2674 = vcvt.s32.f32 %v2642
      %v2675 = vcvt.s32.f32 %v2643
      %v2676 = vcvt.s32.f32 %v2644
      %v2677 = vcvt.s32.f32 %v2645
      %v2678 = vcvt.s32.f32 %v2646
      %v2679 = vcvt.s32.f32 %v2647
      %v2680 = vcvt.s32.f32 %v2648
      %v2681 = vcvt.s32.f32 %v2649
      %v2682 = vcvt.s32.f32 %v2650
      %v2683 = vcvt.s32.f32 %v2651
      %v2684 = vcvt.s32.f32 %v2652
      %v2685 = vld [vmem:[%s219] sm:$0xff]
      %v2686 = vld [vmem:[%s219 + $0x8] sm:$0xff]
      %v2687 = vld [vmem:[%s219 + $0x10] sm:$0xff]
      %v2688 = vld [vmem:[%s219 + $0x18] sm:$0xff]
      %v2689 = vld [vmem:[%s219 + $0x20] sm:$0xff]
      %v2690 = vld [vmem:[%s219 + $0x28] sm:$0xff]
      %v2691 = vld [vmem:[%s219 + $0x30] sm:$0xff]
      %v2692 = vld [vmem:[%s219 + $0x38] sm:$0xff]
      %v2693 = vld [vmem:[%s219 + $0x40] sm:$0xff]
      %v2694 = vld [vmem:[%s219 + $0x48] sm:$0xff]
      %v2695 = vld [vmem:[%s219 + $0x50] sm:$0xff]
      %v2696 = vld [vmem:[%s219 + $0x58] sm:$0xff]
      %v2697 = vld [vmem:[%s219 + $0x60] sm:$0xff]
      %v2698 = vld [vmem:[%s219 + $0x68] sm:$0xff]
      %v2699 = vld [vmem:[%s219 + $0x70] sm:$0xff]
      %v2700 = vld [vmem:[%s219 + $0x78] sm:$0xff]
      %v2701 = vld [vmem:[%s219 + $0x80] sm:$0xff]
      %v2702 = vld [vmem:[%s219 + $0x88] sm:$0xff]
      %v2703 = vld [vmem:[%s219 + $0x90] sm:$0xff]
      %v2704 = vld [vmem:[%s219 + $0x98] sm:$0xff]
      %v2705 = vld [vmem:[%s219 + $0xa0] sm:$0xff]
      %v2706 = vld [vmem:[%s219 + $0xa8] sm:$0xff]
      %v2707 = vld [vmem:[%s219 + $0xb0] sm:$0xff]
      %v2708 = vld [vmem:[%s219 + $0xb8] sm:$0xff]
      %v2709 = vld [vmem:[%s219 + $0xc0] sm:$0xff]
      %v2710 = vld [vmem:[%s219 + $0xc8] sm:$0xff]
      %v2711 = vld [vmem:[%s219 + $0xd0] sm:$0xff]
      %v2712 = vld [vmem:[%s219 + $0xd8] sm:$0xff]
      %v2713 = vld [vmem:[%s219 + $0xe0] sm:$0xff]
      %v2714 = vld [vmem:[%s219 + $0xe8] sm:$0xff]
      %v2715 = vld [vmem:[%s219 + $0xf0] sm:$0xff]
      %v2716 = vld [vmem:[%s219 + $0xf8] sm:$0xff]
      %v2717 = vadd.f32 %v2653, %v2685
      %v2718 = vadd.f32 %v2654, %v2686
      %v2719 = vadd.f32 %v2655, %v2687
      %v2720 = vadd.f32 %v2656, %v2688
      %v2721 = vadd.f32 %v2657, %v2689
      %v2722 = vadd.f32 %v2658, %v2690
      %v2723 = vadd.f32 %v2659, %v2691
      %v2724 = vadd.f32 %v2660, %v2692
      %v2725 = vadd.f32 %v2661, %v2693
      %v2726 = vadd.f32 %v2662, %v2694
      %v2727 = vadd.f32 %v2663, %v2695
      %v2728 = vadd.f32 %v2664, %v2696
      %v2729 = vadd.f32 %v2665, %v2697
      %v2730 = vadd.f32 %v2666, %v2698
      %v2731 = vadd.f32 %v2667, %v2699
      %v2732 = vadd.f32 %v2668, %v2700
      %v2733 = vadd.f32 %v2669, %v2701
      %v2734 = vadd.f32 %v2670, %v2702
      %v2735 = vadd.f32 %v2671, %v2703
      %v2736 = vadd.f32 %v2672, %v2704
      %v2737 = vadd.f32 %v2673, %v2705
      %v2738 = vadd.f32 %v2674, %v2706
      %v2739 = vadd.f32 %v2675, %v2707
      %v2740 = vadd.f32 %v2676, %v2708
      %v2741 = vadd.f32 %v2677, %v2709
      %v2742 = vadd.f32 %v2678, %v2710
      %v2743 = vadd.f32 %v2679, %v2711
      %v2744 = vadd.f32 %v2680, %v2712
      %v2745 = vadd.f32 %v2681, %v2713
      %v2746 = vadd.f32 %v2682, %v2714
      %v2747 = vadd.f32 %v2683, %v2715
      %v2748 = vadd.f32 %v2684, %v2716
      %2749 = vst.msk [vmem:[%s224] sm:$0xff] %vm259, %v2717
      %2750 = vst.msk [vmem:[%s224 + $0x8] sm:$0xff] %vm259, %v2718
      %2751 = vst.msk [vmem:[%s224 + $0x10] sm:$0xff] %vm259, %v2719
      %2752 = vst.msk [vmem:[%s224 + $0x18] sm:$0xff] %vm259, %v2720
      %2753 = vst.msk [vmem:[%s224 + $0x20] sm:$0xff] %vm259, %v2721
      %2754 = vst.msk [vmem:[%s224 + $0x28] sm:$0xff] %vm259, %v2722
      %2755 = vst.msk [vmem:[%s224 + $0x30] sm:$0xff] %vm259, %v2723
      %2756 = vst.msk [vmem:[%s224 + $0x38] sm:$0xff] %vm259, %v2724
      %2757 = vst.msk [vmem:[%s224 + $0x40] sm:$0xff] %vm259, %v2725
      %2758 = vst.msk [vmem:[%s224 + $0x48] sm:$0xff] %vm259, %v2726
      %2759 = vst.msk [vmem:[%s224 + $0x50] sm:$0xff] %vm259, %v2727
      %2760 = vst.msk [vmem:[%s224 + $0x58] sm:$0xff] %vm259, %v2728
      %2761 = vst.msk [vmem:[%s224 + $0x60] sm:$0xff] %vm259, %v2729
      %2762 = vst.msk [vmem:[%s224 + $0x68] sm:$0xff] %vm259, %v2730
      %2763 = vst.msk [vmem:[%s224 + $0x70] sm:$0xff] %vm259, %v2731
      %2764 = vst.msk [vmem:[%s224 + $0x78] sm:$0xff] %vm259, %v2732
      %2765 = vst.msk [vmem:[%s224 + $0x80] sm:$0xff] %vm259, %v2733
      %2766 = vst.msk [vmem:[%s224 + $0x88] sm:$0xff] %vm259, %v2734
      %2767 = vst.msk [vmem:[%s224 + $0x90] sm:$0xff] %vm259, %v2735
      %2768 = vst.msk [vmem:[%s224 + $0x98] sm:$0xff] %vm259, %v2736
      %2769 = vst.msk [vmem:[%s224 + $0xa0] sm:$0xff] %vm259, %v2737
      %2770 = vst.msk [vmem:[%s224 + $0xa8] sm:$0xff] %vm259, %v2738
      %2771 = vst.msk [vmem:[%s224 + $0xb0] sm:$0xff] %vm259, %v2739
      %2772 = vst.msk [vmem:[%s224 + $0xb8] sm:$0xff] %vm259, %v2740
      %2773 = vst.msk [vmem:[%s224 + $0xc0] sm:$0xff] %vm259, %v2741
      %2774 = vst.msk [vmem:[%s224 + $0xc8] sm:$0xff] %vm259, %v2742
      %2775 = vst.msk [vmem:[%s224 + $0xd0] sm:$0xff] %vm259, %v2743
      %2776 = vst.msk [vmem:[%s224 + $0xd8] sm:$0xff] %vm259, %v2744
      %2777 = vst.msk [vmem:[%s224 + $0xe0] sm:$0xff] %vm259, %v2745
      %2778 = vst.msk [vmem:[%s224 + $0xe8] sm:$0xff] %vm259, %v2746
      %2779 = vst.msk [vmem:[%s224 + $0xf0] sm:$0xff] %vm259, %v2747
      %2780 = vst.msk [vmem:[%s224 + $0xf8] sm:$0xff] %vm259, %v2748
      %p2781 = scmp.lt.s32.totalorder %s16, 1
      %s2782 = scalar_select %p2781, %s16, 1
      %s2783 = smul.addr %s2782, 32
      %s2784 = smul.addr %s2783, 8
      %s2785 = scalar_lea.vmem %s5, %s2784
      // Predicated region
      $region41: #{tpu_custom_call.1} parent=39 // pred_check
        %p2786 = pneg %p144
      $region42: #{tpu_custom_call.1} parent=39 // pred_check_branch
        %2788 = sbr.rel (%p2786) target = $region44
      $region43: #{tpu_custom_call.1} parent=39 // pred_region
        _
      $region44: #{tpu_custom_call.1} parent=39 // pred_fallthru
        _
    $region40: #{tpu_custom_call.1} parent=5 // pred_fallthru
      _
    %p2789 = scmp.le.s32.totalorder 2, %s11
    // Predicated region
    $region45: #{tpu_custom_call.1} parent=5 // pred_check
      %p2790 = pneg %p2789
    $region46: #{tpu_custom_call.1} parent=5 // pred_check_branch
      %2792 = sbr.rel (%p2790) target = $region48
    $region47: #{tpu_custom_call.1} parent=5 // pred_region
      %s2793 = ssub.s32 %s11, 2
      // Predicated region
      $region49: #{tpu_custom_call.1} parent=47 // pred_check
        %p2794 = pneg %p150
      $region50: #{tpu_custom_call.1} parent=47 // pred_check_branch
        %2796 = sbr.rel (%p2794) target = $region52
      $region51: #{tpu_custom_call.1} parent=47 // pred_region
        %p2797 = scmp.lt.s32.totalorder %s17, 1
        %s2798 = scalar_select %p2797, %s17, 1
        %s2799 = smul.addr %s2798, 32
        %s2800 = smul.addr %s2799, 8
        %s2801 = scalar_lea.vmem %s5, %s2800
      $region52: #{tpu_custom_call.1} parent=47 // pred_fallthru
        _
    $region48: #{tpu_custom_call.1} parent=5 // pred_fallthru
      _
  $region6: #{tpu_custom_call.1} parent=0 // loop_footer
    %s15 = sadd.s32 1, %s11
  $region7: #{tpu_custom_call.1} parent=0 // loop_footer_branch
    %10 = sbr.rel target = $region3
  $region8: #{tpu_custom_call.1} parent=0 // loop_exit
    _

</llo_original>
